<compile_context>
chip_gen: v7x
topology: tpu7x:2x2x1
jax: 0.10.0
libtpu: 0.0.40
codegen_flags: <defaults>
</compile_context>

<pallas_src>
import functools

import jax
import jax.numpy as jnp
from jax.experimental import pallas as pl
from jax.experimental.pallas import tpu as pltpu


def _cnn_kernel(ids_ref, emb_ref, wstk_ref, cb_ref, fcw_ref, fcb_ref, out_ref,
                *, seq_len, block_b):
    L = seq_len
    bm = block_b
    M = bm * L                               # token rows handled this grid step
    Vp, E = emb_ref.shape

    # ---- embedding gather: one-hot via iota compare, one MXU matmul ---------
    ids = ids_ref[...]                                              # (M, 1) int32
    iota_v = jax.lax.broadcasted_iota(jnp.int32, (M, Vp), 1)
    one_hot = (iota_v == ids).astype(jnp.float32)                   # (M, Vp)
    x = jnp.dot(one_hot, emb_ref[...],
                preferred_element_type=jnp.float32)                 # (M, E)

    # ---- neighbour taps for Conv1d(k=3, padding=1) --------------------------
    # Rows are batch-major / position-minor, so position-in-sequence = row % L.
    pos = jax.lax.broadcasted_iota(jnp.int32, (M, 1), 0) % L        # (M, 1)
    x_prev = jnp.where(pos == 0, 0.0, pltpu.roll(x, shift=1, axis=0))
    x_next = jnp.where(pos == L - 1, 0.0, pltpu.roll(x, shift=M - 1, axis=0))

    # ---- conv: three accumulating (E x E) MXU matmuls (tap k hits t + k - 1)
    y = jnp.dot(x_prev, wstk_ref[0], preferred_element_type=jnp.float32)
    y = y + jnp.dot(x, wstk_ref[1], preferred_element_type=jnp.float32)
    y = y + jnp.dot(x_next, wstk_ref[2], preferred_element_type=jnp.float32)
    y = jnp.maximum(y + cb_ref[...], 0.0)                           # bias + ReLU

    # ---- mean over the sequence axis ----------------------------------------
    pooled = jnp.sum(y.reshape(bm, L, E), axis=1) * (1.0 / L)       # (bm, E)

    # ---- Linear(E, 2): single contraction, emitted transposed (2, bm) so the
    #      output store is lane-dense ----------------------------------------
    logits_t = jax.lax.dot_general(
        fcw_ref[...], pooled, (((1,), (1,)), ((), ())),
        preferred_element_type=jnp.float32)                         # (2, bm)
    out_ref[...] = (logits_t + fcb_ref[...]).astype(out_ref.dtype)


def text_cnn_forward(text, emb_table, conv_w, conv_b, fc_w, fc_b, *, block_b=None):
    """text: (B, L) int32 ids.   emb_table: (V, E).
       conv_w: (E, E, 3) PyTorch (out, in, k).   conv_b: (E,).
       fc_w: (2, E) PyTorch (out, in).           fc_b: (2,)."""
    B, L = text.shape
    V, E = emb_table.shape

    if block_b is None:
        # Target a few hundred token rows per grid step; one block at demo
        # sizes.  When splitting, keep block_b a multiple of 128 so the
        # transposed (2, block_b) output block stays lane-dense and legal.
        # TODO(synk): on v7x prefer >= 2 batch blocks so both TensorCores work.
        block_b = B
        if B * L > 1024 and B % 128 == 0:
            cand = max(128, (1024 // L) // 128 * 128)
            if B % cand == 0:
                block_b = cand
    assert B % block_b == 0, (B, block_b)
    assert block_b == B or block_b % 128 == 0, block_b
    n_blocks = B // block_b
    M = block_b * L

    # Lane-aligned (128-padded) vocab; padded rows are zero and also absorb any
    # out-of-range token id (one-hot row of zeros -> zero embedding).
    Vp = ((V + 127) // 128) * 128
    emb_pad = jnp.pad(emb_table.astype(jnp.float32), ((0, Vp - V), (0, 0)))

    # Per-tap conv weights: tap k multiplies token position t + k - 1.
    w_stack = jnp.stack([conv_w[:, :, k].T for k in range(3)], axis=0)      # (3, E, E)
    w_stack = w_stack.astype(jnp.float32)
    cb = conv_b.reshape(1, E).astype(jnp.float32)
    fcw = fc_w.astype(jnp.float32)                                          # (2, E)
    fcb = fc_b.reshape(2, 1).astype(jnp.float32)
    ids = text.reshape(B * L, 1).astype(jnp.int32)                          # batch-major / pos-minor

    kernel = functools.partial(_cnn_kernel, seq_len=L, block_b=block_b)

    def resident(shape):
        # Weight-like operand: one full block, same block index every step
        # (stays VMEM-resident across the grid).
        nd = len(shape)
        return pl.BlockSpec(shape, lambda i, _nd=nd: (0,) * _nd)

    out_t = pl.pallas_call(
        kernel,
        out_shape=jax.ShapeDtypeStruct((2, B), jnp.float32),
        grid=(n_blocks,),
        in_specs=[
            pl.BlockSpec((M, 1), lambda i: (i, 0)),     # token ids (VMEM)
            resident((Vp, E)),                          # embedding table
            resident((3, E, E)),                        # conv weights per tap
            resident((1, E)),                           # conv bias
            resident((2, E)),                           # fc weight
            resident((2, 1)),                           # fc bias (column)
        ],
        out_specs=pl.BlockSpec((2, block_b), lambda i: (0, i)),
        compiler_params=pltpu.CompilerParams(
            dimension_semantics=("parallel",),          # shards batch blocks across TCs on v7x
            vmem_limit_bytes=32 * 1024 * 1024,
        ),
    )(ids, emb_pad, w_stack, cb, fcw, fcb)
    return out_t.T                                      # (B, 2)


def reference_forward(text, emb_table, conv_w, conv_b, fc_w, fc_b):
    """Plain-JAX reference matching the PyTorch forward semantics."""
    B, L = text.shape
    embedded = jnp.take(emb_table, text, axis=0)                    # (B, L, E)
    xpad = jnp.pad(embedded, ((0, 0), (1, 1), (0, 0)))
    y = sum(jnp.einsum('ble,oe->blo', xpad[:, k:k + L, :], conv_w[:, :, k],
                       precision=jax.lax.Precision.HIGHEST)
            for k in range(3))
    y = jax.nn.relu(y + conv_b[None, None, :])
    pooled = y.mean(axis=1)                                         # (B, E)
    return jnp.einsum('be,oe->bo', pooled, fc_w,
                      precision=jax.lax.Precision.HIGHEST) + fc_b[None, :]


if __name__ == "__main__":
    vocab_size = 50
    embedding_dim = 32
    batch, seq_len = 16, 8

    key = jax.random.PRNGKey(0)
    k1, k2, k3, k4, k5, k6 = jax.random.split(key, 6)

    # Deterministic synthetic parameters (shapes follow the PyTorch module).
    emb_table = jax.random.normal(k1, (vocab_size, embedding_dim), jnp.float32)
    conv_w = 0.1 * jax.random.normal(k2, (embedding_dim, embedding_dim, 3), jnp.float32)
    conv_b = 0.1 * jax.random.normal(k3, (embedding_dim,), jnp.float32)
    fc_w = 0.1 * jax.random.normal(k4, (2, embedding_dim), jnp.float32)   # PyTorch (out, in)
    fc_b = 0.1 * jax.random.normal(k5, (2,), jnp.float32)
    text = jax.random.randint(k6, (batch, seq_len), 0, vocab_size, dtype=jnp.int32)

    out = jax.block_until_ready(
        text_cnn_forward(text, emb_table, conv_w, conv_b, fc_w, fc_b))
    ref = reference_forward(text, emb_table, conv_w, conv_b, fc_w, fc_b)

    assert out.shape == (batch, 2), out.shape
    # Tolerance covers possible bf16 multi-pass MXU lowering of f32 matmuls;
    # any structural bug (wrong tap/shift, mask, pooling) produces O(0.1+) error.
    assert jnp.allclose(out, ref, atol=1e-2, rtol=1e-2), (out, ref)
    print("KERNEL_OK")
</pallas_src>

<mosaic_0001>
module attributes {stable_mosaic.version = 11 : i64} {
  func.func @_cnn_kernel(%arg0: i32, %arg1: memref<128x1xi32, #tpu.memory_space<vmem>>, %arg2: memref<128x32xf32, #tpu.memory_space<vmem>>, %arg3: memref<3x32x32xf32, #tpu.memory_space<vmem>>, %arg4: memref<1x32xf32, #tpu.memory_space<vmem>>, %arg5: memref<2x32xf32, #tpu.memory_space<vmem>>, %arg6: memref<2x1xf32, #tpu.memory_space<vmem>>, %arg7: memref<2x16xf32, #tpu.memory_space<vmem>>) attributes {dimension_semantics = [#tpu.dimension_semantics<parallel>], iteration_bounds = array<i64: 1>, scalar_prefetch = 0 : i64, scratch_operands = 0 : i64, tpu.core_type = #tpu.core_type<tc>, window_params = [{transform_indices = @transform_0, window_bounds = array<i64: 128, 1>}, {pipeline_mode = #tpu.pipeline_mode<synchronous>, transform_indices = @transform_1, window_bounds = array<i64: 128, 32>}, {pipeline_mode = #tpu.pipeline_mode<synchronous>, transform_indices = @transform_2, window_bounds = array<i64: 3, 32, 32>}, {pipeline_mode = #tpu.pipeline_mode<synchronous>, transform_indices = @transform_3, window_bounds = array<i64: 1, 32>}, {pipeline_mode = #tpu.pipeline_mode<synchronous>, transform_indices = @transform_4, window_bounds = array<i64: 2, 32>}, {pipeline_mode = #tpu.pipeline_mode<synchronous>, transform_indices = @transform_5, window_bounds = array<i64: 2, 1>}, {transform_indices = @transform_6, window_bounds = array<i64: 2, 16>}]} {
    %c0 = arith.constant 0 : index
    %c0_0 = arith.constant 0 : index
    %0 = vector.load %arg1[%c0, %c0_0] : memref<128x1xi32, #tpu.memory_space<vmem>>, vector<128x1xi32>
    %1 = tpu.iota {dimensions = array<i32: 1>} : vector<128x128xi32>
    %2 = vector.broadcast %0 : vector<128x1xi32> to vector<128x128xi32>
    %3 = arith.cmpi eq, %1, %2 : vector<128x128xi32>
    %4 = arith.extui %3 : vector<128x128xi1> to vector<128x128xi32>
    %5 = arith.sitofp %4 : vector<128x128xi32> to vector<128x128xf32>
    %c0_1 = arith.constant 0 : index
    %c0_2 = arith.constant 0 : index
    %6 = vector.load %arg2[%c0_1, %c0_2] : memref<128x32xf32, #tpu.memory_space<vmem>>, vector<128x32xf32>
    %cst = arith.constant dense<0.000000e+00> : vector<128x32xf32>
    %7 = tpu.matmul %5, %6, %cst {dimension_numbers = #tpu.dot_dimension_numbers<[1], [0], [0], [1], [0, 0, 1, 1], [], []>} : vector<128x128xf32>, vector<128x32xf32>, vector<128x32xf32> -> vector<128x32xf32>
    %8 = tpu.iota {dimensions = array<i32: 0>} : vector<128x1xi32>
    %c8_i32 = arith.constant 8 : i32
    %c0_i32 = arith.constant 0 : i32
    %9 = arith.cmpi eq, %c8_i32, %c0_i32 : i32
    %c1_i32 = arith.constant 1 : i32
    %10 = arith.select %9, %c1_i32, %c8_i32 : i32
    %11 = vector.broadcast %10 : i32 to vector<128x1xi32>
    %12 = arith.remsi %8, %11 : vector<128x1xi32>
    %c0_i32_3 = arith.constant 0 : i32
    %13 = vector.broadcast %c0_i32_3 : i32 to vector<128x1xi32>
    %14 = arith.cmpi ne, %12, %13 : vector<128x1xi32>
    %c0_i32_4 = arith.constant 0 : i32
    %15 = vector.broadcast %c0_i32_4 : i32 to vector<128x1xi32>
    %16 = arith.cmpi slt, %12, %15 : vector<128x1xi32>
    %c0_i32_5 = arith.constant 0 : i32
    %17 = arith.cmpi slt, %10, %c0_i32_5 : i32
    %18 = vector.broadcast %17 : i1 to vector<128x1xi1>
    %19 = vector.broadcast %18 : vector<128x1xi1> to vector<128x1xi1>
    %20 = arith.xori %16, %19 : vector<128x1xi1>
    %21 = arith.andi %20, %14 : vector<128x1xi1>
    %22 = vector.broadcast %10 : i32 to vector<128x1xi32>
    %23 = arith.addi %12, %22 : vector<128x1xi32>
    %24 = arith.select %21, %23, %12 : vector<128x1xi1>, vector<128x1xi32>
    %c0_i32_6 = arith.constant 0 : i32
    %25 = vector.broadcast %c0_i32_6 : i32 to vector<128x1xi32>
    %26 = arith.cmpi eq, %24, %25 : vector<128x1xi32>
    %c1_i32_7 = arith.constant 1 : i32
    %27 = tpu.dynamic_rotate %7 by %c1_i32_7 dim 0 : vector<128x32xf32>, i32 -> vector<128x32xf32>
    %cst_8 = arith.constant 0.000000e+00 : f32
    %28 = vector.shape_cast %26 : vector<128x1xi1> to vector<128x1xi1>
    %29 = vector.broadcast %28 : vector<128x1xi1> to vector<128x32xi1>
    %30 = vector.broadcast %cst_8 : f32 to vector<128x32xf32>
    %31 = arith.select %29, %30, %27 : vector<128x32xi1>, vector<128x32xf32>
    %c7_i32 = arith.constant 7 : i32
    %32 = vector.broadcast %c7_i32 : i32 to vector<128x1xi32>
    %33 = arith.cmpi eq, %24, %32 : vector<128x1xi32>
    %c127_i32 = arith.constant 127 : i32
    %34 = tpu.dynamic_rotate %7 by %c127_i32 dim 0 : vector<128x32xf32>, i32 -> vector<128x32xf32>
    %cst_9 = arith.constant 0.000000e+00 : f32
    %35 = vector.shape_cast %33 : vector<128x1xi1> to vector<128x1xi1>
    %36 = vector.broadcast %35 : vector<128x1xi1> to vector<128x32xi1>
    %37 = vector.broadcast %cst_9 : f32 to vector<128x32xf32>
    %38 = arith.select %36, %37, %34 : vector<128x32xi1>, vector<128x32xf32>
    %c0_10 = arith.constant 0 : index
    %c0_11 = arith.constant 0 : index
    %c0_12 = arith.constant 0 : index
    %39 = vector.load %arg3[%c0_10, %c0_11, %c0_12] : memref<3x32x32xf32, #tpu.memory_space<vmem>>, vector<1x32x32xf32>
    %40 = vector.shape_cast %39 : vector<1x32x32xf32> to vector<32x32xf32>
    %cst_13 = arith.constant dense<0.000000e+00> : vector<128x32xf32>
    %41 = tpu.matmul %31, %40, %cst_13 {dimension_numbers = #tpu.dot_dimension_numbers<[1], [0], [0], [1], [0, 0, 1, 1], [], []>} : vector<128x32xf32>, vector<32x32xf32>, vector<128x32xf32> -> vector<128x32xf32>
    %c1 = arith.constant 1 : index
    %c0_14 = arith.constant 0 : index
    %c0_15 = arith.constant 0 : index
    %42 = vector.load %arg3[%c1, %c0_14, %c0_15] : memref<3x32x32xf32, #tpu.memory_space<vmem>>, vector<1x32x32xf32>
    %43 = vector.shape_cast %42 : vector<1x32x32xf32> to vector<32x32xf32>
    %cst_16 = arith.constant dense<0.000000e+00> : vector<128x32xf32>
    %44 = tpu.matmul %7, %43, %cst_16 {dimension_numbers = #tpu.dot_dimension_numbers<[1], [0], [0], [1], [0, 0, 1, 1], [], []>} : vector<128x32xf32>, vector<32x32xf32>, vector<128x32xf32> -> vector<128x32xf32>
    %45 = arith.addf %41, %44 : vector<128x32xf32>
    %c2 = arith.constant 2 : index
    %c0_17 = arith.constant 0 : index
    %c0_18 = arith.constant 0 : index
    %46 = vector.load %arg3[%c2, %c0_17, %c0_18] : memref<3x32x32xf32, #tpu.memory_space<vmem>>, vector<1x32x32xf32>
    %47 = vector.shape_cast %46 : vector<1x32x32xf32> to vector<32x32xf32>
    %cst_19 = arith.constant dense<0.000000e+00> : vector<128x32xf32>
    %48 = tpu.matmul %38, %47, %cst_19 {dimension_numbers = #tpu.dot_dimension_numbers<[1], [0], [0], [1], [0, 0, 1, 1], [], []>} : vector<128x32xf32>, vector<32x32xf32>, vector<128x32xf32> -> vector<128x32xf32>
    %49 = arith.addf %45, %48 : vector<128x32xf32>
    %c0_20 = arith.constant 0 : index
    %c0_21 = arith.constant 0 : index
    %50 = vector.load %arg4[%c0_20, %c0_21] : memref<1x32xf32, #tpu.memory_space<vmem>>, vector<1x32xf32>
    %51 = vector.broadcast %50 : vector<1x32xf32> to vector<128x32xf32>
    %52 = arith.addf %49, %51 : vector<128x32xf32>
    %cst_22 = arith.constant 0.000000e+00 : f32
    %53 = vector.broadcast %cst_22 : f32 to vector<128x32xf32>
    %54 = arith.maximumf %52, %53 : vector<128x32xf32>
    %55 = vector.shape_cast %54 : vector<128x32xf32> to vector<16x8x32xf32>
    %cst_23 = arith.constant dense<0.000000e+00> : vector<16x32xf32>
    %56 = vector.multi_reduction <add>, %55, %cst_23 [1] : vector<16x8x32xf32> to vector<16x32xf32>
    %cst_24 = arith.constant 1.250000e-01 : f32
    %57 = vector.broadcast %cst_24 : f32 to vector<16x32xf32>
    %58 = arith.mulf %56, %57 : vector<16x32xf32>
    %c0_25 = arith.constant 0 : index
    %c0_26 = arith.constant 0 : index
    %59 = vector.load %arg5[%c0_25, %c0_26] : memref<2x32xf32, #tpu.memory_space<vmem>>, vector<2x32xf32>
    %cst_27 = arith.constant dense<0.000000e+00> : vector<2x16xf32>
    %60 = tpu.matmul %59, %58, %cst_27 {dimension_numbers = #tpu.dot_dimension_numbers<[1], [1], [0], [0], [0, 0, 1, 0], [], []>} : vector<2x32xf32>, vector<16x32xf32>, vector<2x16xf32> -> vector<2x16xf32>
    %c0_28 = arith.constant 0 : index
    %c0_29 = arith.constant 0 : index
    %61 = vector.load %arg6[%c0_28, %c0_29] : memref<2x1xf32, #tpu.memory_space<vmem>>, vector<2x1xf32>
    %62 = vector.broadcast %61 : vector<2x1xf32> to vector<2x16xf32>
    %63 = arith.addf %60, %62 : vector<2x16xf32>
    %c0_30 = arith.constant 0 : index
    %c0_31 = arith.constant 0 : index
    %64 = vector.load %arg7[%c0_30, %c0_31] : memref<2x16xf32, #tpu.memory_space<vmem>>, vector<2x16xf32>
    tpu.vector_store %arg7[%c0_30, %c0_31], %63 {strides = array<i32>} : memref<2x16xf32, #tpu.memory_space<vmem>>, vector<2x16xf32>,
    return
  }
  func.func @transform_0(%arg0: i32) -> (i32, i32) {
    %c0_i32 = arith.constant 0 : i32
    %c0_i32_0 = arith.constant 0 : i32
    return %arg0, %c0_i32 : i32, i32
  }
  func.func @transform_1(%arg0: i32) -> (i32, i32) {
    %c0_i32 = arith.constant 0 : i32
    %c0_i32_0 = arith.constant 0 : i32
    %c0_i32_1 = arith.constant 0 : i32
    return %c0_i32, %c0_i32_0 : i32, i32
  }
  func.func @transform_2(%arg0: i32) -> (i32, i32, i32) {
    %c0_i32 = arith.constant 0 : i32
    %c0_i32_0 = arith.constant 0 : i32
    %c0_i32_1 = arith.constant 0 : i32
    %c0_i32_2 = arith.constant 0 : i32
    return %c0_i32, %c0_i32_0, %c0_i32_1 : i32, i32, i32
  }
  func.func @transform_3(%arg0: i32) -> (i32, i32) {
    %c0_i32 = arith.constant 0 : i32
    %c0_i32_0 = arith.constant 0 : i32
    %c0_i32_1 = arith.constant 0 : i32
    return %c0_i32, %c0_i32_0 : i32, i32
  }
  func.func @transform_4(%arg0: i32) -> (i32, i32) {
    %c0_i32 = arith.constant 0 : i32
    %c0_i32_0 = arith.constant 0 : i32
    %c0_i32_1 = arith.constant 0 : i32
    return %c0_i32, %c0_i32_0 : i32, i32
  }
  func.func @transform_5(%arg0: i32) -> (i32, i32) {
    %c0_i32 = arith.constant 0 : i32
    %c0_i32_0 = arith.constant 0 : i32
    %c0_i32_1 = arith.constant 0 : i32
    return %c0_i32, %c0_i32_0 : i32, i32
  }
  func.func @transform_6(%arg0: i32) -> (i32, i32) {
    %c0_i32 = arith.constant 0 : i32
    %c0_i32_0 = arith.constant 0 : i32
    return %c0_i32, %arg0 : i32, i32
  }
}

</mosaic_0001>

<llo_original>
// kernel: tpu_custom_call.1
$region0: #{tpu_custom_call.1}
  #allocation0 [shape = 'u32[]', space=smem, size = 0x4, offset = 0x4, fixed_abs, tag = 'smem constant byte address 0x4 - core index']
  #allocation1 [shape = 'u32[144,128]{1,0:T(1,128)}', space=vmem, size = 0x12000, scoped, tag = 'internal scratch']
  %s0 = inlined_call_operand.vmem [shape: s32[128,1], index: 0, kind: input, shape index: {}]
  %s1 = inlined_call_operand.vmem [shape: f32[128,32], index: 1, kind: input, shape index: {}]
  %s2 = inlined_call_operand.vmem [shape: f32[3,32,32], index: 2, kind: input, shape index: {}]
  %s3 = inlined_call_operand.vmem [shape: f32[1,32], index: 3, kind: input, shape index: {}]
  %s4 = inlined_call_operand.vmem [shape: f32[2,32], index: 4, kind: input, shape index: {}]
  %s5 = inlined_call_operand.vmem [shape: f32[2,1], index: 5, kind: input, shape index: {}]
  %s6 = inlined_call_operand.hbm [shape: f32[2,16], index: 6, kind: output, shape index: {}]
  %s7 = sld [smem:[#allocation0]]
  $region34: #{tpu_custom_call.1} parent=0
    _
  %s9 = ssub.s32 1, %s7
  %s10 = scalar_select 0, %s9, %s7
  $region1: #{tpu_custom_call.1} parent=0
    #allocation2 [shape = 'u8[1024]{0}', space=vmem, size = 0x400, scoped, tag = 'output window, operand 0, single buffered']
    #allocation3 [shape = 's32[1]{0}', space=sflag, size = 0x4, scoped, tag = 'scoped memory for tpu_custom_call.1']
    %11 = vsyncpa [#allocation3], 0
    // Predicated region
    $region2: #{tpu_custom_call.1} parent=1 // pred_check
      _
    $region3: #{tpu_custom_call.1} parent=1 // pred_check_branch
      %13 = sbr.rel (0) target = $region5
    $region4: #{tpu_custom_call.1} parent=1 // pred_region
      _
    $region5: #{tpu_custom_call.1} parent=1 // pred_fallthru
      _
    // Predicated region
    $region6: #{tpu_custom_call.1} parent=1 // pred_check
      _
    $region7: #{tpu_custom_call.1} parent=1 // pred_check_branch
      %15 = sbr.rel (0) target = $region9
    $region8: #{tpu_custom_call.1} parent=1 // pred_region
      _
    $region9: #{tpu_custom_call.1} parent=1 // pred_fallthru
      _
    // Predicated region
    $region10: #{tpu_custom_call.1} parent=1 // pred_check
      _
    $region11: #{tpu_custom_call.1} parent=1 // pred_check_branch
      %17 = sbr.rel (0) target = $region13
    $region12: #{tpu_custom_call.1} parent=1 // pred_region
      _
    $region13: #{tpu_custom_call.1} parent=1 // pred_fallthru
      _
    // Predicated region
    $region14: #{tpu_custom_call.1} parent=1 // pred_check
      _
    $region15: #{tpu_custom_call.1} parent=1 // pred_check_branch
      %19 = sbr.rel (0) target = $region17
    $region16: #{tpu_custom_call.1} parent=1 // pred_region
      _
    $region17: #{tpu_custom_call.1} parent=1 // pred_fallthru
      _
    // Predicated region
    $region18: #{tpu_custom_call.1} parent=1 // pred_check
      _
    $region19: #{tpu_custom_call.1} parent=1 // pred_check_branch
      %21 = sbr.rel (0) target = $region21
    $region20: #{tpu_custom_call.1} parent=1 // pred_region
      _
    $region21: #{tpu_custom_call.1} parent=1 // pred_fallthru
      _
    // Predicated region
    $region22: #{tpu_custom_call.1} parent=1 // pred_check
      _
    $region23: #{tpu_custom_call.1} parent=1 // pred_check_branch
      %23 = sbr.rel (0) target = $region25
    $region24: #{tpu_custom_call.1} parent=1 // pred_region
      _
    $region25: #{tpu_custom_call.1} parent=1 // pred_fallthru
      _
    %v24 = vld [vmem:[%s0] sm:$0xff]
    %v25 = vld [vmem:[%s0 + $0x8] sm:$0xff]
    %v26 = vld [vmem:[%s0 + $0x10] sm:$0xff]
    %v27 = vld [vmem:[%s0 + $0x18] sm:$0xff]
    %v28 = vld [vmem:[%s0 + $0x20] sm:$0xff]
    %v29 = vld [vmem:[%s0 + $0x28] sm:$0xff]
    %v30 = vld [vmem:[%s0 + $0x30] sm:$0xff]
    %v31 = vld [vmem:[%s0 + $0x38] sm:$0xff]
    %v32 = vld [vmem:[%s0 + $0x40] sm:$0xff]
    %v33 = vld [vmem:[%s0 + $0x48] sm:$0xff]
    %v34 = vld [vmem:[%s0 + $0x50] sm:$0xff]
    %v35 = vld [vmem:[%s0 + $0x58] sm:$0xff]
    %v36 = vld [vmem:[%s0 + $0x60] sm:$0xff]
    %v37 = vld [vmem:[%s0 + $0x68] sm:$0xff]
    %v38 = vld [vmem:[%s0 + $0x70] sm:$0xff]
    %v39 = vld [vmem:[%s0 + $0x78] sm:$0xff]
    %v40 = vlaneseq
    %v41 = vand.u32 %v40, 127
    %42 = vset.pattern.permute.xlu0 0
    %43 = vperm.xlu0 %42, %v24
    %v44 = vpop.permute.xlu0 %43
    %45 = vset.pattern.permute.xlu0 0
    %46 = vperm.xlu0 %45, %v25
    %v47 = vpop.permute.xlu0 %46
    %48 = vset.pattern.permute.xlu0 0
    %49 = vperm.xlu0 %48, %v26
    %v50 = vpop.permute.xlu0 %49
    %51 = vset.pattern.permute.xlu0 0
    %52 = vperm.xlu0 %51, %v27
    %v53 = vpop.permute.xlu0 %52
    %54 = vset.pattern.permute.xlu0 0
    %55 = vperm.xlu0 %54, %v28
    %v56 = vpop.permute.xlu0 %55
    %57 = vset.pattern.permute.xlu0 0
    %58 = vperm.xlu0 %57, %v29
    %v59 = vpop.permute.xlu0 %58
    %60 = vset.pattern.permute.xlu0 0
    %61 = vperm.xlu0 %60, %v30
    %v62 = vpop.permute.xlu0 %61
    %63 = vset.pattern.permute.xlu0 0
    %64 = vperm.xlu0 %63, %v31
    %v65 = vpop.permute.xlu0 %64
    %66 = vset.pattern.permute.xlu0 0
    %67 = vperm.xlu0 %66, %v32
    %v68 = vpop.permute.xlu0 %67
    %69 = vset.pattern.permute.xlu0 0
    %70 = vperm.xlu0 %69, %v33
    %v71 = vpop.permute.xlu0 %70
    %72 = vset.pattern.permute.xlu0 0
    %73 = vperm.xlu0 %72, %v34
    %v74 = vpop.permute.xlu0 %73
    %75 = vset.pattern.permute.xlu0 0
    %76 = vperm.xlu0 %75, %v35
    %v77 = vpop.permute.xlu0 %76
    %78 = vset.pattern.permute.xlu0 0
    %79 = vperm.xlu0 %78, %v36
    %v80 = vpop.permute.xlu0 %79
    %81 = vset.pattern.permute.xlu0 0
    %82 = vperm.xlu0 %81, %v37
    %v83 = vpop.permute.xlu0 %82
    %84 = vset.pattern.permute.xlu0 0
    %85 = vperm.xlu0 %84, %v38
    %v86 = vpop.permute.xlu0 %85
    %87 = vset.pattern.permute.xlu0 0
    %88 = vperm.xlu0 %87, %v39
    %v89 = vpop.permute.xlu0 %88
    %vm90 = vcmp.eq.s32.totalorder %v41, %v44
    %vm91 = vcmp.eq.s32.totalorder %v41, %v47
    %vm92 = vcmp.eq.s32.totalorder %v41, %v50
    %vm93 = vcmp.eq.s32.totalorder %v41, %v53
    %vm94 = vcmp.eq.s32.totalorder %v41, %v56
    %vm95 = vcmp.eq.s32.totalorder %v41, %v59
    %vm96 = vcmp.eq.s32.totalorder %v41, %v62
    %vm97 = vcmp.eq.s32.totalorder %v41, %v65
    %vm98 = vcmp.eq.s32.totalorder %v41, %v68
    %vm99 = vcmp.eq.s32.totalorder %v41, %v71
    %vm100 = vcmp.eq.s32.totalorder %v41, %v74
    %vm101 = vcmp.eq.s32.totalorder %v41, %v77
    %vm102 = vcmp.eq.s32.totalorder %v41, %v80
    %vm103 = vcmp.eq.s32.totalorder %v41, %v83
    %vm104 = vcmp.eq.s32.totalorder %v41, %v86
    %vm105 = vcmp.eq.s32.totalorder %v41, %v89
    %v106 = vsel %vm90, 1, 0
    %v107 = vsel %vm91, 1, 0
    %v108 = vsel %vm92, 1, 0
    %v109 = vsel %vm93, 1, 0
    %v110 = vsel %vm94, 1, 0
    %v111 = vsel %vm95, 1, 0
    %v112 = vsel %vm96, 1, 0
    %v113 = vsel %vm97, 1, 0
    %v114 = vsel %vm98, 1, 0
    %v115 = vsel %vm99, 1, 0
    %v116 = vsel %vm100, 1, 0
    %v117 = vsel %vm101, 1, 0
    %v118 = vsel %vm102, 1, 0
    %v119 = vsel %vm103, 1, 0
    %v120 = vsel %vm104, 1, 0
    %v121 = vsel %vm105, 1, 0
    %v122 = vcvt.s32.f32 %v106
    %v123 = vcvt.s32.f32 %v107
    %v124 = vcvt.s32.f32 %v108
    %v125 = vcvt.s32.f32 %v109
    %v126 = vcvt.s32.f32 %v110
    %v127 = vcvt.s32.f32 %v111
    %v128 = vcvt.s32.f32 %v112
    %v129 = vcvt.s32.f32 %v113
    %v130 = vcvt.s32.f32 %v114
    %v131 = vcvt.s32.f32 %v115
    %v132 = vcvt.s32.f32 %v116
    %v133 = vcvt.s32.f32 %v117
    %v134 = vcvt.s32.f32 %v118
    %v135 = vcvt.s32.f32 %v119
    %v136 = vcvt.s32.f32 %v120
    %v137 = vcvt.s32.f32 %v121
    %v138 = vld [vmem:[%s1] sm:$0xff]
    %v139 = vld [vmem:[%s1 + $0x8] sm:$0xff]
    %v140 = vld [vmem:[%s1 + $0x10] sm:$0xff]
    %v141 = vld [vmem:[%s1 + $0x18] sm:$0xff]
    %v142 = vld [vmem:[%s1 + $0x20] sm:$0xff]
    %v143 = vld [vmem:[%s1 + $0x28] sm:$0xff]
    %v144 = vld [vmem:[%s1 + $0x30] sm:$0xff]
    %v145 = vld [vmem:[%s1 + $0x38] sm:$0xff]
    %v146 = vld [vmem:[%s1 + $0x40] sm:$0xff]
    %v147 = vld [vmem:[%s1 + $0x48] sm:$0xff]
    %v148 = vld [vmem:[%s1 + $0x50] sm:$0xff]
    %v149 = vld [vmem:[%s1 + $0x58] sm:$0xff]
    %v150 = vld [vmem:[%s1 + $0x60] sm:$0xff]
    %v151 = vld [vmem:[%s1 + $0x68] sm:$0xff]
    %v152 = vld [vmem:[%s1 + $0x70] sm:$0xff]
    %v153 = vld [vmem:[%s1 + $0x78] sm:$0xff]
    %154 = vmatprep.subr.mxu0 0.0
    %155 = vmatpush1.msra.mxu0 %v138
    %156 = vmatprep.subr.mxu0 0.0
    %157 = vmatpush1.msra.mxu0 %v139
    %158 = vmatprep.subr.mxu0 0.0
    %159 = vmatpush1.msra.mxu0 %v140
    %160 = vmatprep.subr.mxu0 0.0
    %161 = vmatpush1.msra.mxu0 %v141
    %162 = vmatprep.subr.mxu0 0.0
    %163 = vmatpush1.msra.mxu0 %v142
    %164 = vmatprep.subr.mxu0 0.0
    %165 = vmatpush1.msra.mxu0 %v143
    %166 = vmatprep.subr.mxu0 0.0
    %167 = vmatpush1.msra.mxu0 %v144
    %168 = vmatprep.subr.mxu0 0.0
    %169 = vmatpush1.msra.mxu0 %v145
    %170 = vmatprep.subr.mxu0 0.0
    %171 = vmatpush1.msra.mxu0 %v146
    %172 = vmatprep.subr.mxu0 0.0
    %173 = vmatpush1.msra.mxu0 %v147
    %174 = vmatprep.subr.mxu0 0.0
    %175 = vmatpush1.msra.mxu0 %v148
    %176 = vmatprep.subr.mxu0 0.0
    %177 = vmatpush1.msra.mxu0 %v149
    %178 = vmatprep.subr.mxu0 0.0
    %179 = vmatpush1.msra.mxu0 %v150
    %180 = vmatprep.subr.mxu0 0.0
    %181 = vmatpush1.msra.mxu0 %v151
    %182 = vmatprep.subr.mxu0 0.0
    %183 = vmatpush1.msra.mxu0 %v152
    %184 = vmatprep.subr.mxu0 0.0
    %185 = vmatpush1.msra.mxu0 %v153
    %186 = vmatprep.subr.mxu0 0.0
    %187 = vmatpush1.msra.mxu0 0.0
    %188 = vmatprep.subr.mxu0 0.0
    %189 = vmatpush1.msra.mxu0 0.0
    %190 = vmatprep.subr.mxu0 0.0
    %191 = vmatpush1.msra.mxu0 0.0
    %192 = vmatprep.subr.mxu0 0.0
    %193 = vmatpush1.msra.mxu0 0.0
    %194 = vmatprep.subr.mxu0 0.0
    %195 = vmatpush1.msra.mxu0 0.0
    %196 = vmatprep.subr.mxu0 0.0
    %197 = vmatpush1.msra.mxu0 0.0
    %198 = vmatprep.subr.mxu0 0.0
    %199 = vmatpush1.msra.mxu0 0.0
    %200 = vmatprep.subr.mxu0 0.0
    %201 = vmatpush1.msra.mxu0 0.0
    %202 = vmatprep.subr.mxu0 0.0
    %203 = vmatpush1.msra.mxu0 0.0
    %204 = vmatprep.subr.mxu0 0.0
    %205 = vmatpush1.msra.mxu0 0.0
    %206 = vmatprep.subr.mxu0 0.0
    %207 = vmatpush1.msra.mxu0 0.0
    %208 = vmatprep.subr.mxu0 0.0
    %209 = vmatpush1.msra.mxu0 0.0
    %210 = vmatprep.subr.mxu0 0.0
    %211 = vmatpush1.msra.mxu0 0.0
    %212 = vmatprep.subr.mxu0 0.0
    %213 = vmatpush1.msra.mxu0 0.0
    %214 = vmatprep.subr.mxu0 0.0
    %215 = vmatpush1.msra.mxu0 0.0
    %216 = vmatprep.subr.mxu0 0.0
    %217 = vmatpush1.msra.mxu0 0.0
    %218 = vmatprep.mubr.f32.mxu0 0.0
    %219 = vmatmul.mubr.f32.gmra.mrb[0].mxu0 %v122
    %v220 = vpop.f32.mrb[0].mxu0
    %v221 = vadd.f32 0.0, %v220
    %v222 = vpop.f32.mrb[0].mxu0
    %223 = vmatprep.mubr.f32.mxu0 0.0
    %224 = vmatmul.mubr.f32.gmra.mrb[0].mxu0 %v123
    %v225 = vpop.f32.mrb[0].mxu0
    %v226 = vadd.f32 0.0, %v225
    %v227 = vpop.f32.mrb[0].mxu0
    %228 = vmatprep.mubr.f32.mxu0 0.0
    %229 = vmatmul.mubr.f32.gmra.mrb[0].mxu0 %v124
    %v230 = vpop.f32.mrb[0].mxu0
    %v231 = vadd.f32 0.0, %v230
    %v232 = vpop.f32.mrb[0].mxu0
    %233 = vmatprep.mubr.f32.mxu0 0.0
    %234 = vmatmul.mubr.f32.gmra.mrb[0].mxu0 %v125
    %v235 = vpop.f32.mrb[0].mxu0
    %v236 = vadd.f32 0.0, %v235
    %v237 = vpop.f32.mrb[0].mxu0
    %238 = vmatprep.mubr.f32.mxu0 0.0
    %239 = vmatmul.mubr.f32.gmra.mrb[0].mxu0 %v126
    %v240 = vpop.f32.mrb[0].mxu0
    %v241 = vadd.f32 0.0, %v240
    %v242 = vpop.f32.mrb[0].mxu0
    %243 = vmatprep.mubr.f32.mxu0 0.0
    %244 = vmatmul.mubr.f32.gmra.mrb[0].mxu0 %v127
    %v245 = vpop.f32.mrb[0].mxu0
    %v246 = vadd.f32 0.0, %v245
    %v247 = vpop.f32.mrb[0].mxu0
    %248 = vmatprep.mubr.f32.mxu0 0.0
    %249 = vmatmul.mubr.f32.gmra.mrb[0].mxu0 %v128
    %v250 = vpop.f32.mrb[0].mxu0
    %v251 = vadd.f32 0.0, %v250
    %v252 = vpop.f32.mrb[0].mxu0
    %253 = vmatprep.mubr.f32.mxu0 0.0
    %254 = vmatmul.mubr.f32.gmra.mrb[0].mxu0 %v129
    %v255 = vpop.f32.mrb[0].mxu0
    %v256 = vadd.f32 0.0, %v255
    %v257 = vpop.f32.mrb[0].mxu0
    %258 = vmatprep.mubr.f32.mxu0 0.0
    %259 = vmatmul.mubr.f32.gmra.mrb[0].mxu0 %v130
    %v260 = vpop.f32.mrb[0].mxu0
    %v261 = vadd.f32 0.0, %v260
    %v262 = vpop.f32.mrb[0].mxu0
    %263 = vmatprep.mubr.f32.mxu0 0.0
    %264 = vmatmul.mubr.f32.gmra.mrb[0].mxu0 %v131
    %v265 = vpop.f32.mrb[0].mxu0
    %v266 = vadd.f32 0.0, %v265
    %v267 = vpop.f32.mrb[0].mxu0
    %268 = vmatprep.mubr.f32.mxu0 0.0
    %269 = vmatmul.mubr.f32.gmra.mrb[0].mxu0 %v132
    %v270 = vpop.f32.mrb[0].mxu0
    %v271 = vadd.f32 0.0, %v270
    %v272 = vpop.f32.mrb[0].mxu0
    %273 = vmatprep.mubr.f32.mxu0 0.0
    %274 = vmatmul.mubr.f32.gmra.mrb[0].mxu0 %v133
    %v275 = vpop.f32.mrb[0].mxu0
    %v276 = vadd.f32 0.0, %v275
    %v277 = vpop.f32.mrb[0].mxu0
    %278 = vmatprep.mubr.f32.mxu0 0.0
    %279 = vmatmul.mubr.f32.gmra.mrb[0].mxu0 %v134
    %v280 = vpop.f32.mrb[0].mxu0
    %v281 = vadd.f32 0.0, %v280
    %v282 = vpop.f32.mrb[0].mxu0
    %283 = vmatprep.mubr.f32.mxu0 0.0
    %284 = vmatmul.mubr.f32.gmra.mrb[0].mxu0 %v135
    %v285 = vpop.f32.mrb[0].mxu0
    %v286 = vadd.f32 0.0, %v285
    %v287 = vpop.f32.mrb[0].mxu0
    %288 = vmatprep.mubr.f32.mxu0 0.0
    %289 = vmatmul.mubr.f32.gmra.mrb[0].mxu0 %v136
    %v290 = vpop.f32.mrb[0].mxu0
    %v291 = vadd.f32 0.0, %v290
    %v292 = vpop.f32.mrb[0].mxu0
    %293 = vmatprep.mubr.f32.mxu0 0.0
    %294 = vmatmul.mubr.f32.gmra.mrb[0].mxu0 %v137
    %v295 = vpop.f32.mrb[0].mxu0
    %v296 = vadd.f32 0.0, %v295
    %v297 = vpop.f32.mrb[0].mxu0
    %298 = vdwg.mxu0
    %v299 = vlaneseq
    %v300 = vshrl.u32 %v299, 7
    %v301 = vadd.s32 %v300, 8
    %v302 = vadd.s32 %v300, 16
    %v303 = vadd.s32 %v300, 24
    %v304 = vadd.s32 %v300, 32
    %v305 = vadd.s32 %v300, 40
    %v306 = vadd.s32 %v300, 48
    %v307 = vadd.s32 %v300, 56
    %v308 = vadd.s32 %v300, 64
    %v309 = vadd.s32 %v300, 72
    %v310 = vadd.s32 %v300, 80
    %v311 = vadd.s32 %v300, 88
    %v312 = vadd.s32 %v300, 96
    %v313 = vadd.s32 %v300, 104
    %v314 = vadd.s32 %v300, 112
    %v315 = vadd.s32 %v300, 120
    %vm316 = vcmp.lt.s32.totalorder %v300, 0
    %v317 = vsub.s32 0, %v300
    %v318 = vsel %vm316, %v317, %v300
    %v319 = vshrl.u32 %v318, 3
    %v320 = vand.u32 %v318, 7
    %v321 = vsub.s32 0, %v320
    %v322 = vsel %vm316, %v321, %v320
    %vm323 = vcmp.lt.s32.totalorder %v301, 0
    %v324 = vsub.s32 0, %v301
    %v325 = vsel %vm323, %v324, %v301
    %v326 = vshrl.u32 %v325, 3
    %v327 = vand.u32 %v325, 7
    %v328 = vsub.s32 0, %v327
    %v329 = vsel %vm323, %v328, %v327
    %vm330 = vcmp.lt.s32.totalorder %v302, 0
    %v331 = vsub.s32 0, %v302
    %v332 = vsel %vm330, %v331, %v302
    %v333 = vshrl.u32 %v332, 3
    %v334 = vand.u32 %v332, 7
    %v335 = vsub.s32 0, %v334
    %v336 = vsel %vm330, %v335, %v334
    %vm337 = vcmp.lt.s32.totalorder %v303, 0
    %v338 = vsub.s32 0, %v303
    %v339 = vsel %vm337, %v338, %v303
    %v340 = vshrl.u32 %v339, 3
    %v341 = vand.u32 %v339, 7
    %v342 = vsub.s32 0, %v341
    %v343 = vsel %vm337, %v342, %v341
    %vm344 = vcmp.lt.s32.totalorder %v304, 0
    %v345 = vsub.s32 0, %v304
    %v346 = vsel %vm344, %v345, %v304
    %v347 = vshrl.u32 %v346, 3
    %v348 = vand.u32 %v346, 7
    %v349 = vsub.s32 0, %v348
    %v350 = vsel %vm344, %v349, %v348
    %vm351 = vcmp.lt.s32.totalorder %v305, 0
    %v352 = vsub.s32 0, %v305
    %v353 = vsel %vm351, %v352, %v305
    %v354 = vshrl.u32 %v353, 3
    %v355 = vand.u32 %v353, 7
    %v356 = vsub.s32 0, %v355
    %v357 = vsel %vm351, %v356, %v355
    %vm358 = vcmp.lt.s32.totalorder %v306, 0
    %v359 = vsub.s32 0, %v306
    %v360 = vsel %vm358, %v359, %v306
    %v361 = vshrl.u32 %v360, 3
    %v362 = vand.u32 %v360, 7
    %v363 = vsub.s32 0, %v362
    %v364 = vsel %vm358, %v363, %v362
    %vm365 = vcmp.lt.s32.totalorder %v307, 0
    %v366 = vsub.s32 0, %v307
    %v367 = vsel %vm365, %v366, %v307
    %v368 = vshrl.u32 %v367, 3
    %v369 = vand.u32 %v367, 7
    %v370 = vsub.s32 0, %v369
    %v371 = vsel %vm365, %v370, %v369
    %vm372 = vcmp.lt.s32.totalorder %v308, 0
    %v373 = vsub.s32 0, %v308
    %v374 = vsel %vm372, %v373, %v308
    %v375 = vshrl.u32 %v374, 3
    %v376 = vand.u32 %v374, 7
    %v377 = vsub.s32 0, %v376
    %v378 = vsel %vm372, %v377, %v376
    %vm379 = vcmp.lt.s32.totalorder %v309, 0
    %v380 = vsub.s32 0, %v309
    %v381 = vsel %vm379, %v380, %v309
    %v382 = vshrl.u32 %v381, 3
    %v383 = vand.u32 %v381, 7
    %v384 = vsub.s32 0, %v383
    %v385 = vsel %vm379, %v384, %v383
    %vm386 = vcmp.lt.s32.totalorder %v310, 0
    %v387 = vsub.s32 0, %v310
    %v388 = vsel %vm386, %v387, %v310
    %v389 = vshrl.u32 %v388, 3
    %v390 = vand.u32 %v388, 7
    %v391 = vsub.s32 0, %v390
    %v392 = vsel %vm386, %v391, %v390
    %vm393 = vcmp.lt.s32.totalorder %v311, 0
    %v394 = vsub.s32 0, %v311
    %v395 = vsel %vm393, %v394, %v311
    %v396 = vshrl.u32 %v395, 3
    %v397 = vand.u32 %v395, 7
    %v398 = vsub.s32 0, %v397
    %v399 = vsel %vm393, %v398, %v397
    %vm400 = vcmp.lt.s32.totalorder %v312, 0
    %v401 = vsub.s32 0, %v312
    %v402 = vsel %vm400, %v401, %v312
    %v403 = vshrl.u32 %v402, 3
    %v404 = vand.u32 %v402, 7
    %v405 = vsub.s32 0, %v404
    %v406 = vsel %vm400, %v405, %v404
    %vm407 = vcmp.lt.s32.totalorder %v313, 0
    %v408 = vsub.s32 0, %v313
    %v409 = vsel %vm407, %v408, %v313
    %v410 = vshrl.u32 %v409, 3
    %v411 = vand.u32 %v409, 7
    %v412 = vsub.s32 0, %v411
    %v413 = vsel %vm407, %v412, %v411
    %vm414 = vcmp.lt.s32.totalorder %v314, 0
    %v415 = vsub.s32 0, %v314
    %v416 = vsel %vm414, %v415, %v314
    %v417 = vshrl.u32 %v416, 3
    %v418 = vand.u32 %v416, 7
    %v419 = vsub.s32 0, %v418
    %v420 = vsel %vm414, %v419, %v418
    %vm421 = vcmp.lt.s32.totalorder %v315, 0
    %v422 = vsub.s32 0, %v315
    %v423 = vsel %vm421, %v422, %v315
    %v424 = vshrl.u32 %v423, 3
    %v425 = vand.u32 %v423, 7
    %v426 = vsub.s32 0, %v425
    %v427 = vsel %vm421, %v426, %v425
    %vm428 = vcmp.ne.s32.totalorder %v322, 0
    %vm429 = vcmp.ne.s32.totalorder %v329, 0
    %vm430 = vcmp.ne.s32.totalorder %v336, 0
    %vm431 = vcmp.ne.s32.totalorder %v343, 0
    %vm432 = vcmp.ne.s32.totalorder %v350, 0
    %vm433 = vcmp.ne.s32.totalorder %v357, 0
    %vm434 = vcmp.ne.s32.totalorder %v364, 0
    %vm435 = vcmp.ne.s32.totalorder %v371, 0
    %vm436 = vcmp.ne.s32.totalorder %v378, 0
    %vm437 = vcmp.ne.s32.totalorder %v385, 0
    %vm438 = vcmp.ne.s32.totalorder %v392, 0
    %vm439 = vcmp.ne.s32.totalorder %v399, 0
    %vm440 = vcmp.ne.s32.totalorder %v406, 0
    %vm441 = vcmp.ne.s32.totalorder %v413, 0
    %vm442 = vcmp.ne.s32.totalorder %v420, 0
    %vm443 = vcmp.ne.s32.totalorder %v427, 0
    %vm444 = vcmp.lt.s32.totalorder %v322, 0
    %vm445 = vcmp.lt.s32.totalorder %v329, 0
    %vm446 = vcmp.lt.s32.totalorder %v336, 0
    %vm447 = vcmp.lt.s32.totalorder %v343, 0
    %vm448 = vcmp.lt.s32.totalorder %v350, 0
    %vm449 = vcmp.lt.s32.totalorder %v357, 0
    %vm450 = vcmp.lt.s32.totalorder %v364, 0
    %vm451 = vcmp.lt.s32.totalorder %v371, 0
    %vm452 = vcmp.lt.s32.totalorder %v378, 0
    %vm453 = vcmp.lt.s32.totalorder %v385, 0
    %vm454 = vcmp.lt.s32.totalorder %v392, 0
    %vm455 = vcmp.lt.s32.totalorder %v399, 0
    %vm456 = vcmp.lt.s32.totalorder %v406, 0
    %vm457 = vcmp.lt.s32.totalorder %v413, 0
    %vm458 = vcmp.lt.s32.totalorder %v420, 0
    %vm459 = vcmp.lt.s32.totalorder %v427, 0
    %vm460 = vmand %vm444, %vm428
    %vm461 = vmand %vm445, %vm429
    %vm462 = vmand %vm446, %vm430
    %vm463 = vmand %vm447, %vm431
    %vm464 = vmand %vm448, %vm432
    %vm465 = vmand %vm449, %vm433
    %vm466 = vmand %vm450, %vm434
    %vm467 = vmand %vm451, %vm435
    %vm468 = vmand %vm452, %vm436
    %vm469 = vmand %vm453, %vm437
    %vm470 = vmand %vm454, %vm438
    %vm471 = vmand %vm455, %vm439
    %vm472 = vmand %vm456, %vm440
    %vm473 = vmand %vm457, %vm441
    %vm474 = vmand %vm458, %vm442
    %vm475 = vmand %vm459, %vm443
    %v476 = vadd.s32 %v322, 8
    %v477 = vadd.s32 %v329, 8
    %v478 = vadd.s32 %v336, 8
    %v479 = vadd.s32 %v343, 8
    %v480 = vadd.s32 %v350, 8
    %v481 = vadd.s32 %v357, 8
    %v482 = vadd.s32 %v364, 8
    %v483 = vadd.s32 %v371, 8
    %v484 = vadd.s32 %v378, 8
    %v485 = vadd.s32 %v385, 8
    %v486 = vadd.s32 %v392, 8
    %v487 = vadd.s32 %v399, 8
    %v488 = vadd.s32 %v406, 8
    %v489 = vadd.s32 %v413, 8
    %v490 = vadd.s32 %v420, 8
    %v491 = vadd.s32 %v427, 8
    %v492 = vsel %vm460, %v476, %v322
    %v493 = vsel %vm461, %v477, %v329
    %v494 = vsel %vm462, %v478, %v336
    %v495 = vsel %vm463, %v479, %v343
    %v496 = vsel %vm464, %v480, %v350
    %v497 = vsel %vm465, %v481, %v357
    %v498 = vsel %vm466, %v482, %v364
    %v499 = vsel %vm467, %v483, %v371
    %v500 = vsel %vm468, %v484, %v378
    %v501 = vsel %vm469, %v485, %v385
    %v502 = vsel %vm470, %v486, %v392
    %v503 = vsel %vm471, %v487, %v399
    %v504 = vsel %vm472, %v488, %v406
    %v505 = vsel %vm473, %v489, %v413
    %v506 = vsel %vm474, %v490, %v420
    %v507 = vsel %vm475, %v491, %v427
    %vm508 = vcmp.eq.s32.totalorder %v492, 0
    %vm509 = vcmp.eq.s32.totalorder %v493, 0
    %vm510 = vcmp.eq.s32.totalorder %v494, 0
    %vm511 = vcmp.eq.s32.totalorder %v495, 0
    %vm512 = vcmp.eq.s32.totalorder %v496, 0
    %vm513 = vcmp.eq.s32.totalorder %v497, 0
    %vm514 = vcmp.eq.s32.totalorder %v498, 0
    %vm515 = vcmp.eq.s32.totalorder %v499, 0
    %vm516 = vcmp.eq.s32.totalorder %v500, 0
    %vm517 = vcmp.eq.s32.totalorder %v501, 0
    %vm518 = vcmp.eq.s32.totalorder %v502, 0
    %vm519 = vcmp.eq.s32.totalorder %v503, 0
    %vm520 = vcmp.eq.s32.totalorder %v504, 0
    %vm521 = vcmp.eq.s32.totalorder %v505, 0
    %vm522 = vcmp.eq.s32.totalorder %v506, 0
    %vm523 = vcmp.eq.s32.totalorder %v507, 0
    %v524 = vrot.slane %v221, 7
    %v525 = vrot.slane %v226, 7
    %v526 = vrot.slane %v231, 7
    %v527 = vrot.slane %v236, 7
    %v528 = vrot.slane %v241, 7
    %v529 = vrot.slane %v246, 7
    %v530 = vrot.slane %v251, 7
    %v531 = vrot.slane %v256, 7
    %v532 = vrot.slane %v261, 7
    %v533 = vrot.slane %v266, 7
    %v534 = vrot.slane %v271, 7
    %v535 = vrot.slane %v276, 7
    %v536 = vrot.slane %v281, 7
    %v537 = vrot.slane %v286, 7
    %v538 = vrot.slane %v291, 7
    %v539 = vrot.slane %v296, 7
    %vm540 = vcmp.lt.s32.totalorder %v300, 1
    %v541 = vsel %vm540, %v538, %v539
    %v542 = vsel %vm540, %v537, %v538
    %v543 = vsel %vm540, %v536, %v537
    %v544 = vsel %vm540, %v535, %v536
    %v545 = vsel %vm540, %v534, %v535
    %v546 = vsel %vm540, %v533, %v534
    %v547 = vsel %vm540, %v532, %v533
    %v548 = vsel %vm540, %v531, %v532
    %v549 = vsel %vm540, %v530, %v531
    %v550 = vsel %vm540, %v529, %v530
    %v551 = vsel %vm540, %v528, %v529
    %v552 = vsel %vm540, %v527, %v528
    %v553 = vsel %vm540, %v526, %v527
    %v554 = vsel %vm540, %v525, %v526
    %v555 = vsel %vm540, %v524, %v525
    %v556 = vsel %vm540, %v539, %v524
    %v557 = vsel %vm508, 1, 0
    %v558 = vsel %vm509, 1, 0
    %v559 = vsel %vm510, 1, 0
    %v560 = vsel %vm511, 1, 0
    %v561 = vsel %vm512, 1, 0
    %v562 = vsel %vm513, 1, 0
    %v563 = vsel %vm514, 1, 0
    %v564 = vsel %vm515, 1, 0
    %v565 = vsel %vm516, 1, 0
    %v566 = vsel %vm517, 1, 0
    %v567 = vsel %vm518, 1, 0
    %v568 = vsel %vm519, 1, 0
    %v569 = vsel %vm520, 1, 0
    %v570 = vsel %vm521, 1, 0
    %v571 = vsel %vm522, 1, 0
    %v572 = vsel %vm523, 1, 0
    %vm573 = vcmp.eq.s32.totalorder %v557, 1
    %vm574 = vcmp.eq.s32.totalorder %v558, 1
    %vm575 = vcmp.eq.s32.totalorder %v559, 1
    %vm576 = vcmp.eq.s32.totalorder %v560, 1
    %vm577 = vcmp.eq.s32.totalorder %v561, 1
    %vm578 = vcmp.eq.s32.totalorder %v562, 1
    %vm579 = vcmp.eq.s32.totalorder %v563, 1
    %vm580 = vcmp.eq.s32.totalorder %v564, 1
    %vm581 = vcmp.eq.s32.totalorder %v565, 1
    %vm582 = vcmp.eq.s32.totalorder %v566, 1
    %vm583 = vcmp.eq.s32.totalorder %v567, 1
    %vm584 = vcmp.eq.s32.totalorder %v568, 1
    %vm585 = vcmp.eq.s32.totalorder %v569, 1
    %vm586 = vcmp.eq.s32.totalorder %v570, 1
    %vm587 = vcmp.eq.s32.totalorder %v571, 1
    %vm588 = vcmp.eq.s32.totalorder %v572, 1
    %v589 = vsel %vm573, 0.0, %v556
    %v590 = vsel %vm574, 0.0, %v555
    %v591 = vsel %vm575, 0.0, %v554
    %v592 = vsel %vm576, 0.0, %v553
    %v593 = vsel %vm577, 0.0, %v552
    %v594 = vsel %vm578, 0.0, %v551
    %v595 = vsel %vm579, 0.0, %v550
    %v596 = vsel %vm580, 0.0, %v549
    %v597 = vsel %vm581, 0.0, %v548
    %v598 = vsel %vm582, 0.0, %v547
    %v599 = vsel %vm583, 0.0, %v546
    %v600 = vsel %vm584, 0.0, %v545
    %v601 = vsel %vm585, 0.0, %v544
    %v602 = vsel %vm586, 0.0, %v543
    %v603 = vsel %vm587, 0.0, %v542
    %v604 = vsel %vm588, 0.0, %v541
    %vm605 = vcmp.eq.s32.totalorder %v492, 7
    %vm606 = vcmp.eq.s32.totalorder %v493, 7
    %vm607 = vcmp.eq.s32.totalorder %v494, 7
    %vm608 = vcmp.eq.s32.totalorder %v495, 7
    %vm609 = vcmp.eq.s32.totalorder %v496, 7
    %vm610 = vcmp.eq.s32.totalorder %v497, 7
    %vm611 = vcmp.eq.s32.totalorder %v498, 7
    %vm612 = vcmp.eq.s32.totalorder %v499, 7
    %vm613 = vcmp.eq.s32.totalorder %v500, 7
    %vm614 = vcmp.eq.s32.totalorder %v501, 7
    %vm615 = vcmp.eq.s32.totalorder %v502, 7
    %vm616 = vcmp.eq.s32.totalorder %v503, 7
    %vm617 = vcmp.eq.s32.totalorder %v504, 7
    %vm618 = vcmp.eq.s32.totalorder %v505, 7
    %vm619 = vcmp.eq.s32.totalorder %v506, 7
    %vm620 = vcmp.eq.s32.totalorder %v507, 7
    %v621 = vrot.slane %v221, 1
    %v622 = vrot.slane %v226, 1
    %v623 = vrot.slane %v231, 1
    %v624 = vrot.slane %v236, 1
    %v625 = vrot.slane %v241, 1
    %v626 = vrot.slane %v246, 1
    %v627 = vrot.slane %v251, 1
    %v628 = vrot.slane %v256, 1
    %v629 = vrot.slane %v261, 1
    %v630 = vrot.slane %v266, 1
    %v631 = vrot.slane %v271, 1
    %v632 = vrot.slane %v276, 1
    %v633 = vrot.slane %v281, 1
    %v634 = vrot.slane %v286, 1
    %v635 = vrot.slane %v291, 1
    %v636 = vrot.slane %v296, 1
    %vm637 = vcmp.lt.s32.totalorder %v300, 7
    %v638 = vsel %vm637, %v635, %v636
    %v639 = vsel %vm637, %v634, %v635
    %v640 = vsel %vm637, %v633, %v634
    %v641 = vsel %vm637, %v632, %v633
    %v642 = vsel %vm637, %v631, %v632
    %v643 = vsel %vm637, %v630, %v631
    %v644 = vsel %vm637, %v629, %v630
    %v645 = vsel %vm637, %v628, %v629
    %v646 = vsel %vm637, %v627, %v628
    %v647 = vsel %vm637, %v626, %v627
    %v648 = vsel %vm637, %v625, %v626
    %v649 = vsel %vm637, %v624, %v625
    %v650 = vsel %vm637, %v623, %v624
    %v651 = vsel %vm637, %v622, %v623
    %v652 = vsel %vm637, %v621, %v622
    %v653 = vsel %vm637, %v636, %v621
    %v654 = vsel %vm605, 1, 0
    %v655 = vsel %vm606, 1, 0
    %v656 = vsel %vm607, 1, 0
    %v657 = vsel %vm608, 1, 0
    %v658 = vsel %vm609, 1, 0
    %v659 = vsel %vm610, 1, 0
    %v660 = vsel %vm611, 1, 0
    %v661 = vsel %vm612, 1, 0
    %v662 = vsel %vm613, 1, 0
    %v663 = vsel %vm614, 1, 0
    %v664 = vsel %vm615, 1, 0
    %v665 = vsel %vm616, 1, 0
    %v666 = vsel %vm617, 1, 0
    %v667 = vsel %vm618, 1, 0
    %v668 = vsel %vm619, 1, 0
    %v669 = vsel %vm620, 1, 0
    %vm670 = vcmp.eq.s32.totalorder %v654, 1
    %vm671 = vcmp.eq.s32.totalorder %v655, 1
    %vm672 = vcmp.eq.s32.totalorder %v656, 1
    %vm673 = vcmp.eq.s32.totalorder %v657, 1
    %vm674 = vcmp.eq.s32.totalorder %v658, 1
    %vm675 = vcmp.eq.s32.totalorder %v659, 1
    %vm676 = vcmp.eq.s32.totalorder %v660, 1
    %vm677 = vcmp.eq.s32.totalorder %v661, 1
    %vm678 = vcmp.eq.s32.totalorder %v662, 1
    %vm679 = vcmp.eq.s32.totalorder %v663, 1
    %vm680 = vcmp.eq.s32.totalorder %v664, 1
    %vm681 = vcmp.eq.s32.totalorder %v665, 1
    %vm682 = vcmp.eq.s32.totalorder %v666, 1
    %vm683 = vcmp.eq.s32.totalorder %v667, 1
    %vm684 = vcmp.eq.s32.totalorder %v668, 1
    %vm685 = vcmp.eq.s32.totalorder %v669, 1
    %v686 = vsel %vm670, 0.0, %v652
    %v687 = vsel %vm671, 0.0, %v651
    %v688 = vsel %vm672, 0.0, %v650
    %v689 = vsel %vm673, 0.0, %v649
    %v690 = vsel %vm674, 0.0, %v648
    %v691 = vsel %vm675, 0.0, %v647
    %v692 = vsel %vm676, 0.0, %v646
    %v693 = vsel %vm677, 0.0, %v645
    %v694 = vsel %vm678, 0.0, %v644
    %v695 = vsel %vm679, 0.0, %v643
    %v696 = vsel %vm680, 0.0, %v642
    %v697 = vsel %vm681, 0.0, %v641
    %v698 = vsel %vm682, 0.0, %v640
    %v699 = vsel %vm683, 0.0, %v639
    %v700 = vsel %vm684, 0.0, %v638
    %v701 = vsel %vm685, 0.0, %v653
    %v702 = vld [vmem:[%s2] sm:$0xff]
    %v703 = vld [vmem:[%s2 + $0x8] sm:$0xff]
    %v704 = vld [vmem:[%s2 + $0x10] sm:$0xff]
    %v705 = vld [vmem:[%s2 + $0x18] sm:$0xff]
    %s706 = scalar_lea.vmem %s2, 32
    %v707 = vld [vmem:[%s706] sm:$0xff]
    %v708 = vld [vmem:[%s706 + $0x8] sm:$0xff]
    %v709 = vld [vmem:[%s706 + $0x10] sm:$0xff]
    %v710 = vld [vmem:[%s706 + $0x18] sm:$0xff]
    %vm711 = vcmask 261120
    %v713 = vsel %vm711, %v221, 0
    %v716 = vsel %vm711, %v226, 0
    %v719 = vsel %vm711, %v231, 0
    %v722 = vsel %vm711, %v236, 0
    %v725 = vsel %vm711, %v241, 0
    %v728 = vsel %vm711, %v246, 0
    %v731 = vsel %vm711, %v251, 0
    %v734 = vsel %vm711, %v256, 0
    %v737 = vsel %vm711, %v261, 0
    %v740 = vsel %vm711, %v266, 0
    %v743 = vsel %vm711, %v271, 0
    %v746 = vsel %vm711, %v276, 0
    %v749 = vsel %vm711, %v281, 0
    %v752 = vsel %vm711, %v286, 0
    %v755 = vsel %vm711, %v291, 0
    %v758 = vsel %vm711, %v296, 0
    %760 = vmatprep.subr.mxu0 0.0
    %761 = vmatpush1.msra.mxu0 %v707
    %762 = vmatprep.subr.mxu0 0.0
    %763 = vmatpush1.msra.mxu0 %v708
    %764 = vmatprep.subr.mxu0 0.0
    %765 = vmatpush1.msra.mxu0 %v709
    %766 = vmatprep.subr.mxu0 0.0
    %767 = vmatpush1.msra.mxu0 %v710
    %768 = vmatprep.subr.mxu0 0.0
    %769 = vmatpush1.msra.mxu0 0.0
    %770 = vmatprep.subr.mxu0 0.0
    %771 = vmatpush1.msra.mxu0 0.0
    %772 = vmatprep.subr.mxu0 0.0
    %773 = vmatpush1.msra.mxu0 0.0
    %774 = vmatprep.subr.mxu0 0.0
    %775 = vmatpush1.msra.mxu0 0.0
    %776 = vmatprep.subr.mxu0 0.0
    %777 = vmatpush1.msra.mxu0 0.0
    %778 = vmatprep.subr.mxu0 0.0
    %779 = vmatpush1.msra.mxu0 0.0
    %780 = vmatprep.subr.mxu0 0.0
    %781 = vmatpush1.msra.mxu0 0.0
    %782 = vmatprep.subr.mxu0 0.0
    %783 = vmatpush1.msra.mxu0 0.0
    %784 = vmatprep.subr.mxu0 0.0
    %785 = vmatpush1.msra.mxu0 0.0
    %786 = vmatprep.subr.mxu0 0.0
    %787 = vmatpush1.msra.mxu0 0.0
    %788 = vmatprep.subr.mxu0 0.0
    %789 = vmatpush1.msra.mxu0 0.0
    %790 = vmatprep.subr.mxu0 0.0
    %791 = vmatpush1.msra.mxu0 0.0
    %792 = vmatprep.subr.mxu0 0.0
    %793 = vmatpush1.msra.mxu0 0.0
    %794 = vmatprep.subr.mxu0 0.0
    %795 = vmatpush1.msra.mxu0 0.0
    %796 = vmatprep.subr.mxu0 0.0
    %797 = vmatpush1.msra.mxu0 0.0
    %798 = vmatprep.subr.mxu0 0.0
    %799 = vmatpush1.msra.mxu0 0.0
    %800 = vmatprep.subr.mxu0 0.0
    %801 = vmatpush1.msra.mxu0 0.0
    %802 = vmatprep.subr.mxu0 0.0
    %803 = vmatpush1.msra.mxu0 0.0
    %804 = vmatprep.subr.mxu0 0.0
    %805 = vmatpush1.msra.mxu0 0.0
    %806 = vmatprep.subr.mxu0 0.0
    %807 = vmatpush1.msra.mxu0 0.0
    %808 = vmatprep.subr.mxu0 0.0
    %809 = vmatpush1.msra.mxu0 0.0
    %810 = vmatprep.subr.mxu0 0.0
    %811 = vmatpush1.msra.mxu0 0.0
    %812 = vmatprep.subr.mxu0 0.0
    %813 = vmatpush1.msra.mxu0 0.0
    %814 = vmatprep.subr.mxu0 0.0
    %815 = vmatpush1.msra.mxu0 0.0
    %816 = vmatprep.subr.mxu0 0.0
    %817 = vmatpush1.msra.mxu0 0.0
    %818 = vmatprep.subr.mxu0 0.0
    %819 = vmatpush1.msra.mxu0 0.0
    %820 = vmatprep.subr.mxu0 0.0
    %821 = vmatpush1.msra.mxu0 0.0
    %822 = vmatprep.subr.mxu0 0.0
    %823 = vmatpush1.msra.mxu0 0.0
    %824 = vmatprep.mubr.f32.mxu0 0.0
    %825 = vmatmul.mubr.f32.gmra.mrb[0].mxu0 %v713
    %v826 = vpop.f32.mrb[0].mxu0
    %v827 = vadd.f32 0.0, %v826
    %v828 = vpop.f32.mrb[0].mxu0
    %829 = vmatprep.mubr.f32.mxu0 0.0
    %830 = vmatmul.mubr.f32.gmra.mrb[0].mxu0 %v716
    %v831 = vpop.f32.mrb[0].mxu0
    %v832 = vadd.f32 0.0, %v831
    %v833 = vpop.f32.mrb[0].mxu0
    %834 = vmatprep.mubr.f32.mxu0 0.0
    %835 = vmatmul.mubr.f32.gmra.mrb[0].mxu0 %v719
    %v836 = vpop.f32.mrb[0].mxu0
    %v837 = vadd.f32 0.0, %v836
    %v838 = vpop.f32.mrb[0].mxu0
    %839 = vmatprep.mubr.f32.mxu0 0.0
    %840 = vmatmul.mubr.f32.gmra.mrb[0].mxu0 %v722
    %v841 = vpop.f32.mrb[0].mxu0
    %v842 = vadd.f32 0.0, %v841
    %v843 = vpop.f32.mrb[0].mxu0
    %844 = vmatprep.mubr.f32.mxu0 0.0
    %845 = vmatmul.mubr.f32.gmra.mrb[0].mxu0 %v725
    %v846 = vpop.f32.mrb[0].mxu0
    %v847 = vadd.f32 0.0, %v846
    %v848 = vpop.f32.mrb[0].mxu0
    %849 = vmatprep.mubr.f32.mxu0 0.0
    %850 = vmatmul.mubr.f32.gmra.mrb[0].mxu0 %v728
    %v851 = vpop.f32.mrb[0].mxu0
    %v852 = vadd.f32 0.0, %v851
    %v853 = vpop.f32.mrb[0].mxu0
    %854 = vmatprep.mubr.f32.mxu0 0.0
    %855 = vmatmul.mubr.f32.gmra.mrb[0].mxu0 %v731
    %v856 = vpop.f32.mrb[0].mxu0
    %v857 = vadd.f32 0.0, %v856
    %v858 = vpop.f32.mrb[0].mxu0
    %859 = vmatprep.mubr.f32.mxu0 0.0
    %860 = vmatmul.mubr.f32.gmra.mrb[0].mxu0 %v734
    %v861 = vpop.f32.mrb[0].mxu0
    %v862 = vadd.f32 0.0, %v861
    %v863 = vpop.f32.mrb[0].mxu0
    %864 = vmatprep.mubr.f32.mxu0 0.0
    %865 = vmatmul.mubr.f32.gmra.mrb[0].mxu0 %v737
    %v866 = vpop.f32.mrb[0].mxu0
    %v867 = vadd.f32 0.0, %v866
    %v868 = vpop.f32.mrb[0].mxu0
    %869 = vmatprep.mubr.f32.mxu0 0.0
    %870 = vmatmul.mubr.f32.gmra.mrb[0].mxu0 %v740
    %v871 = vpop.f32.mrb[0].mxu0
    %v872 = vadd.f32 0.0, %v871
    %v873 = vpop.f32.mrb[0].mxu0
    %874 = vmatprep.mubr.f32.mxu0 0.0
    %875 = vmatmul.mubr.f32.gmra.mrb[0].mxu0 %v743
    %v876 = vpop.f32.mrb[0].mxu0
    %v877 = vadd.f32 0.0, %v876
    %v878 = vpop.f32.mrb[0].mxu0
    %879 = vmatprep.mubr.f32.mxu0 0.0
    %880 = vmatmul.mubr.f32.gmra.mrb[0].mxu0 %v746
    %v881 = vpop.f32.mrb[0].mxu0
    %v882 = vadd.f32 0.0, %v881
    %v883 = vpop.f32.mrb[0].mxu0
    %884 = vmatprep.mubr.f32.mxu0 0.0
    %885 = vmatmul.mubr.f32.gmra.mrb[0].mxu0 %v749
    %v886 = vpop.f32.mrb[0].mxu0
    %v887 = vadd.f32 0.0, %v886
    %v888 = vpop.f32.mrb[0].mxu0
    %889 = vmatprep.mubr.f32.mxu0 0.0
    %890 = vmatmul.mubr.f32.gmra.mrb[0].mxu0 %v752
    %v891 = vpop.f32.mrb[0].mxu0
    %v892 = vadd.f32 0.0, %v891
    %v893 = vpop.f32.mrb[0].mxu0
    %894 = vmatprep.mubr.f32.mxu0 0.0
    %895 = vmatmul.mubr.f32.gmra.mrb[0].mxu0 %v755
    %v896 = vpop.f32.mrb[0].mxu0
    %v897 = vadd.f32 0.0, %v896
    %v898 = vpop.f32.mrb[0].mxu0
    %899 = vmatprep.mubr.f32.mxu0 0.0
    %900 = vmatmul.mubr.f32.gmra.mrb[0].mxu0 %v758
    %v901 = vpop.f32.mrb[0].mxu0
    %v902 = vadd.f32 0.0, %v901
    %v903 = vpop.f32.mrb[0].mxu0
    %904 = vdwg.mxu0
    %v906 = vsel %vm711, %v589, 0
    %v909 = vsel %vm711, %v590, 0
    %v912 = vsel %vm711, %v591, 0
    %v915 = vsel %vm711, %v592, 0
    %v918 = vsel %vm711, %v593, 0
    %v921 = vsel %vm711, %v594, 0
    %v924 = vsel %vm711, %v595, 0
    %v927 = vsel %vm711, %v596, 0
    %v930 = vsel %vm711, %v597, 0
    %v933 = vsel %vm711, %v598, 0
    %v936 = vsel %vm711, %v599, 0
    %v939 = vsel %vm711, %v600, 0
    %v942 = vsel %vm711, %v601, 0
    %v945 = vsel %vm711, %v602, 0
    %v948 = vsel %vm711, %v603, 0
    %v951 = vsel %vm711, %v604, 0
    %953 = vmatprep.subr.mxu0 0.0
    %954 = vmatpush1.msra.mxu0 %v702
    %955 = vmatprep.subr.mxu0 0.0
    %956 = vmatpush1.msra.mxu0 %v703
    %957 = vmatprep.subr.mxu0 0.0
    %958 = vmatpush1.msra.mxu0 %v704
    %959 = vmatprep.subr.mxu0 0.0
    %960 = vmatpush1.msra.mxu0 %v705
    %961 = vmatprep.subr.mxu0 0.0
    %962 = vmatpush1.msra.mxu0 0.0
    %963 = vmatprep.subr.mxu0 0.0
    %964 = vmatpush1.msra.mxu0 0.0
    %965 = vmatprep.subr.mxu0 0.0
    %966 = vmatpush1.msra.mxu0 0.0
    %967 = vmatprep.subr.mxu0 0.0
    %968 = vmatpush1.msra.mxu0 0.0
    %969 = vmatprep.subr.mxu0 0.0
    %970 = vmatpush1.msra.mxu0 0.0
    %971 = vmatprep.subr.mxu0 0.0
    %972 = vmatpush1.msra.mxu0 0.0
    %973 = vmatprep.subr.mxu0 0.0
    %974 = vmatpush1.msra.mxu0 0.0
    %975 = vmatprep.subr.mxu0 0.0
    %976 = vmatpush1.msra.mxu0 0.0
    %977 = vmatprep.subr.mxu0 0.0
    %978 = vmatpush1.msra.mxu0 0.0
    %979 = vmatprep.subr.mxu0 0.0
    %980 = vmatpush1.msra.mxu0 0.0
    %981 = vmatprep.subr.mxu0 0.0
    %982 = vmatpush1.msra.mxu0 0.0
    %983 = vmatprep.subr.mxu0 0.0
    %984 = vmatpush1.msra.mxu0 0.0
    %985 = vmatprep.subr.mxu0 0.0
    %986 = vmatpush1.msra.mxu0 0.0
    %987 = vmatprep.subr.mxu0 0.0
    %988 = vmatpush1.msra.mxu0 0.0
    %989 = vmatprep.subr.mxu0 0.0
    %990 = vmatpush1.msra.mxu0 0.0
    %991 = vmatprep.subr.mxu0 0.0
    %992 = vmatpush1.msra.mxu0 0.0
    %993 = vmatprep.subr.mxu0 0.0
    %994 = vmatpush1.msra.mxu0 0.0
    %995 = vmatprep.subr.mxu0 0.0
    %996 = vmatpush1.msra.mxu0 0.0
    %997 = vmatprep.subr.mxu0 0.0
    %998 = vmatpush1.msra.mxu0 0.0
    %999 = vmatprep.subr.mxu0 0.0
    %1000 = vmatpush1.msra.mxu0 0.0
    %1001 = vmatprep.subr.mxu0 0.0
    %1002 = vmatpush1.msra.mxu0 0.0
    %1003 = vmatprep.subr.mxu0 0.0
    %1004 = vmatpush1.msra.mxu0 0.0
    %1005 = vmatprep.subr.mxu0 0.0
    %1006 = vmatpush1.msra.mxu0 0.0
    %1007 = vmatprep.subr.mxu0 0.0
    %1008 = vmatpush1.msra.mxu0 0.0
    %1009 = vmatprep.subr.mxu0 0.0
    %1010 = vmatpush1.msra.mxu0 0.0
    %1011 = vmatprep.subr.mxu0 0.0
    %1012 = vmatpush1.msra.mxu0 0.0
    %1013 = vmatprep.subr.mxu0 0.0
    %1014 = vmatpush1.msra.mxu0 0.0
    %1015 = vmatprep.subr.mxu0 0.0
    %1016 = vmatpush1.msra.mxu0 0.0
    %1017 = vmatprep.mubr.f32.mxu0 0.0
    %1018 = vmatmul.mubr.f32.gmra.mrb[0].mxu0 %v906
    %v1019 = vpop.f32.mrb[0].mxu0
    %v1020 = vadd.f32 %v827, %v1019
    %v1021 = vpop.f32.mrb[0].mxu0
    %1022 = vmatprep.mubr.f32.mxu0 0.0
    %1023 = vmatmul.mubr.f32.gmra.mrb[0].mxu0 %v909
    %v1024 = vpop.f32.mrb[0].mxu0
    %v1025 = vadd.f32 %v832, %v1024
    %v1026 = vpop.f32.mrb[0].mxu0
    %1027 = vmatprep.mubr.f32.mxu0 0.0
    %1028 = vmatmul.mubr.f32.gmra.mrb[0].mxu0 %v912
    %v1029 = vpop.f32.mrb[0].mxu0
    %v1030 = vadd.f32 %v837, %v1029
    %v1031 = vpop.f32.mrb[0].mxu0
    %1032 = vmatprep.mubr.f32.mxu0 0.0
    %1033 = vmatmul.mubr.f32.gmra.mrb[0].mxu0 %v915
    %v1034 = vpop.f32.mrb[0].mxu0
    %v1035 = vadd.f32 %v842, %v1034
    %v1036 = vpop.f32.mrb[0].mxu0
    %1037 = vmatprep.mubr.f32.mxu0 0.0
    %1038 = vmatmul.mubr.f32.gmra.mrb[0].mxu0 %v918
    %v1039 = vpop.f32.mrb[0].mxu0
    %v1040 = vadd.f32 %v847, %v1039
    %v1041 = vpop.f32.mrb[0].mxu0
    %1042 = vmatprep.mubr.f32.mxu0 0.0
    %1043 = vmatmul.mubr.f32.gmra.mrb[0].mxu0 %v921
    %v1044 = vpop.f32.mrb[0].mxu0
    %v1045 = vadd.f32 %v852, %v1044
    %v1046 = vpop.f32.mrb[0].mxu0
    %1047 = vmatprep.mubr.f32.mxu0 0.0
    %1048 = vmatmul.mubr.f32.gmra.mrb[0].mxu0 %v924
    %v1049 = vpop.f32.mrb[0].mxu0
    %v1050 = vadd.f32 %v857, %v1049
    %v1051 = vpop.f32.mrb[0].mxu0
    %1052 = vmatprep.mubr.f32.mxu0 0.0
    %1053 = vmatmul.mubr.f32.gmra.mrb[0].mxu0 %v927
    %v1054 = vpop.f32.mrb[0].mxu0
    %v1055 = vadd.f32 %v862, %v1054
    %v1056 = vpop.f32.mrb[0].mxu0
    %1057 = vmatprep.mubr.f32.mxu0 0.0
    %1058 = vmatmul.mubr.f32.gmra.mrb[0].mxu0 %v930
    %v1059 = vpop.f32.mrb[0].mxu0
    %v1060 = vadd.f32 %v867, %v1059
    %v1061 = vpop.f32.mrb[0].mxu0
    %1062 = vmatprep.mubr.f32.mxu0 0.0
    %1063 = vmatmul.mubr.f32.gmra.mrb[0].mxu0 %v933
    %v1064 = vpop.f32.mrb[0].mxu0
    %v1065 = vadd.f32 %v872, %v1064
    %v1066 = vpop.f32.mrb[0].mxu0
    %1067 = vmatprep.mubr.f32.mxu0 0.0
    %1068 = vmatmul.mubr.f32.gmra.mrb[0].mxu0 %v936
    %v1069 = vpop.f32.mrb[0].mxu0
    %v1070 = vadd.f32 %v877, %v1069
    %v1071 = vpop.f32.mrb[0].mxu0
    %1072 = vmatprep.mubr.f32.mxu0 0.0
    %1073 = vmatmul.mubr.f32.gmra.mrb[0].mxu0 %v939
    %v1074 = vpop.f32.mrb[0].mxu0
    %v1075 = vadd.f32 %v882, %v1074
    %v1076 = vpop.f32.mrb[0].mxu0
    %1077 = vmatprep.mubr.f32.mxu0 0.0
    %1078 = vmatmul.mubr.f32.gmra.mrb[0].mxu0 %v942
    %v1079 = vpop.f32.mrb[0].mxu0
    %v1080 = vadd.f32 %v887, %v1079
    %v1081 = vpop.f32.mrb[0].mxu0
    %1082 = vmatprep.mubr.f32.mxu0 0.0
    %1083 = vmatmul.mubr.f32.gmra.mrb[0].mxu0 %v945
    %v1084 = vpop.f32.mrb[0].mxu0
    %v1085 = vadd.f32 %v892, %v1084
    %v1086 = vpop.f32.mrb[0].mxu0
    %1087 = vmatprep.mubr.f32.mxu0 0.0
    %1088 = vmatmul.mubr.f32.gmra.mrb[0].mxu0 %v948
    %v1089 = vpop.f32.mrb[0].mxu0
    %v1090 = vadd.f32 %v897, %v1089
    %v1091 = vpop.f32.mrb[0].mxu0
    %1092 = vmatprep.mubr.f32.mxu0 0.0
    %1093 = vmatmul.mubr.f32.gmra.mrb[0].mxu0 %v951
    %v1094 = vpop.f32.mrb[0].mxu0
    %v1095 = vadd.f32 %v902, %v1094
    %v1096 = vpop.f32.mrb[0].mxu0
    %1097 = vdwg.mxu0
    %s1098 = scalar_lea.vmem %s2, 64
    %v1099 = vld [vmem:[%s1098] sm:$0xff]
    %v1100 = vld [vmem:[%s1098 + $0x8] sm:$0xff]
    %v1101 = vld [vmem:[%s1098 + $0x10] sm:$0xff]
    %v1102 = vld [vmem:[%s1098 + $0x18] sm:$0xff]
    %v1104 = vsel %vm711, %v686, 0
    %v1107 = vsel %vm711, %v687, 0
    %v1110 = vsel %vm711, %v688, 0
    %v1113 = vsel %vm711, %v689, 0
    %v1116 = vsel %vm711, %v690, 0
    %v1119 = vsel %vm711, %v691, 0
    %v1122 = vsel %vm711, %v692, 0
    %v1125 = vsel %vm711, %v693, 0
    %v1128 = vsel %vm711, %v694, 0
    %v1131 = vsel %vm711, %v695, 0
    %v1134 = vsel %vm711, %v696, 0
    %v1137 = vsel %vm711, %v697, 0
    %v1140 = vsel %vm711, %v698, 0
    %v1143 = vsel %vm711, %v699, 0
    %v1146 = vsel %vm711, %v700, 0
    %v1149 = vsel %vm711, %v701, 0
    %1151 = vmatprep.subr.mxu0 0.0
    %1152 = vmatpush1.msra.mxu0 %v1099
    %1153 = vmatprep.subr.mxu0 0.0
    %1154 = vmatpush1.msra.mxu0 %v1100
    %1155 = vmatprep.subr.mxu0 0.0
    %1156 = vmatpush1.msra.mxu0 %v1101
    %1157 = vmatprep.subr.mxu0 0.0
    %1158 = vmatpush1.msra.mxu0 %v1102
    %1159 = vmatprep.subr.mxu0 0.0
    %1160 = vmatpush1.msra.mxu0 0.0
    %1161 = vmatprep.subr.mxu0 0.0
    %1162 = vmatpush1.msra.mxu0 0.0
    %1163 = vmatprep.subr.mxu0 0.0
    %1164 = vmatpush1.msra.mxu0 0.0
    %1165 = vmatprep.subr.mxu0 0.0
    %1166 = vmatpush1.msra.mxu0 0.0
    %1167 = vmatprep.subr.mxu0 0.0
    %1168 = vmatpush1.msra.mxu0 0.0
    %1169 = vmatprep.subr.mxu0 0.0
    %1170 = vmatpush1.msra.mxu0 0.0
    %1171 = vmatprep.subr.mxu0 0.0
    %1172 = vmatpush1.msra.mxu0 0.0
    %1173 = vmatprep.subr.mxu0 0.0
    %1174 = vmatpush1.msra.mxu0 0.0
    %1175 = vmatprep.subr.mxu0 0.0
    %1176 = vmatpush1.msra.mxu0 0.0
    %1177 = vmatprep.subr.mxu0 0.0
    %1178 = vmatpush1.msra.mxu0 0.0
    %1179 = vmatprep.subr.mxu0 0.0
    %1180 = vmatpush1.msra.mxu0 0.0
    %1181 = vmatprep.subr.mxu0 0.0
    %1182 = vmatpush1.msra.mxu0 0.0
    %1183 = vmatprep.subr.mxu0 0.0
    %1184 = vmatpush1.msra.mxu0 0.0
    %1185 = vmatprep.subr.mxu0 0.0
    %1186 = vmatpush1.msra.mxu0 0.0
    %1187 = vmatprep.subr.mxu0 0.0
    %1188 = vmatpush1.msra.mxu0 0.0
    %1189 = vmatprep.subr.mxu0 0.0
    %1190 = vmatpush1.msra.mxu0 0.0
    %1191 = vmatprep.subr.mxu0 0.0
    %1192 = vmatpush1.msra.mxu0 0.0
    %1193 = vmatprep.subr.mxu0 0.0
    %1194 = vmatpush1.msra.mxu0 0.0
    %1195 = vmatprep.subr.mxu0 0.0
    %1196 = vmatpush1.msra.mxu0 0.0
    %1197 = vmatprep.subr.mxu0 0.0
    %1198 = vmatpush1.msra.mxu0 0.0
    %1199 = vmatprep.subr.mxu0 0.0
    %1200 = vmatpush1.msra.mxu0 0.0
    %1201 = vmatprep.subr.mxu0 0.0
    %1202 = vmatpush1.msra.mxu0 0.0
    %1203 = vmatprep.subr.mxu0 0.0
    %1204 = vmatpush1.msra.mxu0 0.0
    %1205 = vmatprep.subr.mxu0 0.0
    %1206 = vmatpush1.msra.mxu0 0.0
    %1207 = vmatprep.subr.mxu0 0.0
    %1208 = vmatpush1.msra.mxu0 0.0
    %1209 = vmatprep.subr.mxu0 0.0
    %1210 = vmatpush1.msra.mxu0 0.0
    %1211 = vmatprep.subr.mxu0 0.0
    %1212 = vmatpush1.msra.mxu0 0.0
    %1213 = vmatprep.subr.mxu0 0.0
    %1214 = vmatpush1.msra.mxu0 0.0
    %1215 = vmatprep.mubr.f32.mxu0 0.0
    %1216 = vmatmul.mubr.f32.gmra.mrb[0].mxu0 %v1104
    %v1217 = vpop.f32.mrb[0].mxu0
    %v1218 = vadd.f32 0.0, %v1217
    %v1219 = vpop.f32.mrb[0].mxu0
    %1220 = vmatprep.mubr.f32.mxu0 0.0
    %1221 = vmatmul.mubr.f32.gmra.mrb[0].mxu0 %v1107
    %v1222 = vpop.f32.mrb[0].mxu0
    %v1223 = vadd.f32 0.0, %v1222
    %v1224 = vpop.f32.mrb[0].mxu0
    %1225 = vmatprep.mubr.f32.mxu0 0.0
    %1226 = vmatmul.mubr.f32.gmra.mrb[0].mxu0 %v1110
    %v1227 = vpop.f32.mrb[0].mxu0
    %v1228 = vadd.f32 0.0, %v1227
    %v1229 = vpop.f32.mrb[0].mxu0
    %1230 = vmatprep.mubr.f32.mxu0 0.0
    %1231 = vmatmul.mubr.f32.gmra.mrb[0].mxu0 %v1113
    %v1232 = vpop.f32.mrb[0].mxu0
    %v1233 = vadd.f32 0.0, %v1232
    %v1234 = vpop.f32.mrb[0].mxu0
    %1235 = vmatprep.mubr.f32.mxu0 0.0
    %1236 = vmatmul.mubr.f32.gmra.mrb[0].mxu0 %v1116
    %v1237 = vpop.f32.mrb[0].mxu0
    %v1238 = vadd.f32 0.0, %v1237
    %v1239 = vpop.f32.mrb[0].mxu0
    %1240 = vmatprep.mubr.f32.mxu0 0.0
    %1241 = vmatmul.mubr.f32.gmra.mrb[0].mxu0 %v1119
    %v1242 = vpop.f32.mrb[0].mxu0
    %v1243 = vadd.f32 0.0, %v1242
    %v1244 = vpop.f32.mrb[0].mxu0
    %1245 = vmatprep.mubr.f32.mxu0 0.0
    %1246 = vmatmul.mubr.f32.gmra.mrb[0].mxu0 %v1122
    %v1247 = vpop.f32.mrb[0].mxu0
    %v1248 = vadd.f32 0.0, %v1247
    %v1249 = vpop.f32.mrb[0].mxu0
    %1250 = vmatprep.mubr.f32.mxu0 0.0
    %1251 = vmatmul.mubr.f32.gmra.mrb[0].mxu0 %v1125
    %v1252 = vpop.f32.mrb[0].mxu0
    %v1253 = vadd.f32 0.0, %v1252
    %v1254 = vpop.f32.mrb[0].mxu0
    %1255 = vmatprep.mubr.f32.mxu0 0.0
    %1256 = vmatmul.mubr.f32.gmra.mrb[0].mxu0 %v1128
    %v1257 = vpop.f32.mrb[0].mxu0
    %v1258 = vadd.f32 0.0, %v1257
    %v1259 = vpop.f32.mrb[0].mxu0
    %1260 = vmatprep.mubr.f32.mxu0 0.0
    %1261 = vmatmul.mubr.f32.gmra.mrb[0].mxu0 %v1131
    %v1262 = vpop.f32.mrb[0].mxu0
    %v1263 = vadd.f32 0.0, %v1262
    %v1264 = vpop.f32.mrb[0].mxu0
    %1265 = vmatprep.mubr.f32.mxu0 0.0
    %1266 = vmatmul.mubr.f32.gmra.mrb[0].mxu0 %v1134
    %v1267 = vpop.f32.mrb[0].mxu0
    %v1268 = vadd.f32 0.0, %v1267
    %v1269 = vpop.f32.mrb[0].mxu0
    %1270 = vmatprep.mubr.f32.mxu0 0.0
    %1271 = vmatmul.mubr.f32.gmra.mrb[0].mxu0 %v1137
    %v1272 = vpop.f32.mrb[0].mxu0
    %v1273 = vadd.f32 0.0, %v1272
    %v1274 = vpop.f32.mrb[0].mxu0
    %1275 = vmatprep.mubr.f32.mxu0 0.0
    %1276 = vmatmul.mubr.f32.gmra.mrb[0].mxu0 %v1140
    %v1277 = vpop.f32.mrb[0].mxu0
    %v1278 = vadd.f32 0.0, %v1277
    %v1279 = vpop.f32.mrb[0].mxu0
    %1280 = vmatprep.mubr.f32.mxu0 0.0
    %1281 = vmatmul.mubr.f32.gmra.mrb[0].mxu0 %v1143
    %v1282 = vpop.f32.mrb[0].mxu0
    %v1283 = vadd.f32 0.0, %v1282
    %v1284 = vpop.f32.mrb[0].mxu0
    %1285 = vmatprep.mubr.f32.mxu0 0.0
    %1286 = vmatmul.mubr.f32.gmra.mrb[0].mxu0 %v1146
    %v1287 = vpop.f32.mrb[0].mxu0
    %v1288 = vadd.f32 0.0, %v1287
    %v1289 = vpop.f32.mrb[0].mxu0
    %1290 = vmatprep.mubr.f32.mxu0 0.0
    %1291 = vmatmul.mubr.f32.gmra.mrb[0].mxu0 %v1149
    %v1292 = vpop.f32.mrb[0].mxu0
    %v1293 = vadd.f32 0.0, %v1292
    %v1294 = vpop.f32.mrb[0].mxu0
    %1295 = vdwg.mxu0
    %v1296 = vadd.f32 %v1020, %v1218
    %v1297 = vadd.f32 %v1025, %v1223
    %v1298 = vadd.f32 %v1030, %v1228
    %v1299 = vadd.f32 %v1035, %v1233
    %v1300 = vadd.f32 %v1040, %v1238
    %v1301 = vadd.f32 %v1045, %v1243
    %v1302 = vadd.f32 %v1050, %v1248
    %v1303 = vadd.f32 %v1055, %v1253
    %v1304 = vadd.f32 %v1060, %v1258
    %v1305 = vadd.f32 %v1065, %v1263
    %v1306 = vadd.f32 %v1070, %v1268
    %v1307 = vadd.f32 %v1075, %v1273
    %v1308 = vadd.f32 %v1080, %v1278
    %v1309 = vadd.f32 %v1085, %v1283
    %v1310 = vadd.f32 %v1090, %v1288
    %v1311 = vadd.f32 %v1095, %v1293
    %v1312 = vld [vmem:[%s3] sm:$0x1]
    %v1314 = vlaneseq
    %v1315 = vshrl.u32 %v1314, 7
    %v1316 = vsub.s32 0, %v1315
    %v1317 = vrot.slane %v1312, %v1316
    %v1319 = vadd.f32 %v1296, %v1317
    %v1320 = vadd.f32 %v1297, %v1317
    %v1321 = vadd.f32 %v1298, %v1317
    %v1322 = vadd.f32 %v1299, %v1317
    %v1323 = vadd.f32 %v1300, %v1317
    %v1324 = vadd.f32 %v1301, %v1317
    %v1325 = vadd.f32 %v1302, %v1317
    %v1326 = vadd.f32 %v1303, %v1317
    %v1327 = vadd.f32 %v1304, %v1317
    %v1328 = vadd.f32 %v1305, %v1317
    %v1329 = vadd.f32 %v1306, %v1317
    %v1330 = vadd.f32 %v1307, %v1317
    %v1331 = vadd.f32 %v1308, %v1317
    %v1332 = vadd.f32 %v1309, %v1317
    %v1333 = vadd.f32 %v1310, %v1317
    %v1334 = vadd.f32 %v1311, %v1317
    %v1335 = vmax.f32 %v1319, 0.0
    %v1336 = vmax.f32 %v1320, 0.0
    %v1337 = vmax.f32 %v1321, 0.0
    %v1338 = vmax.f32 %v1322, 0.0
    %v1339 = vmax.f32 %v1323, 0.0
    %v1340 = vmax.f32 %v1324, 0.0
    %v1341 = vmax.f32 %v1325, 0.0
    %v1342 = vmax.f32 %v1326, 0.0
    %v1343 = vmax.f32 %v1327, 0.0
    %v1344 = vmax.f32 %v1328, 0.0
    %v1345 = vmax.f32 %v1329, 0.0
    %v1346 = vmax.f32 %v1330, 0.0
    %v1347 = vmax.f32 %v1331, 0.0
    %v1348 = vmax.f32 %v1332, 0.0
    %v1349 = vmax.f32 %v1333, 0.0
    %v1350 = vmax.f32 %v1334, 0.0
    %v1351 = vsel %vm711, %v1335, 0.0
    %v1352 = vrot.slane %v1351, 4
    %v1353 = vadd.f32 %v1351, %v1352
    %v1354 = vrot.slane %v1353, 2
    %v1355 = vadd.f32 %v1353, %v1354
    %v1356 = vrot.slane %v1355, 1
    %v1357 = vadd.f32 %v1355, %v1356
    %v1358 = vsel %vm711, %v1336, 0.0
    %v1359 = vrot.slane %v1358, 4
    %v1360 = vadd.f32 %v1358, %v1359
    %v1361 = vrot.slane %v1360, 2
    %v1362 = vadd.f32 %v1360, %v1361
    %v1363 = vrot.slane %v1362, 1
    %v1364 = vadd.f32 %v1362, %v1363
    %v1365 = vsel %vm711, %v1337, 0.0
    %v1366 = vrot.slane %v1365, 4
    %v1367 = vadd.f32 %v1365, %v1366
    %v1368 = vrot.slane %v1367, 2
    %v1369 = vadd.f32 %v1367, %v1368
    %v1370 = vrot.slane %v1369, 1
    %v1371 = vadd.f32 %v1369, %v1370
    %v1372 = vsel %vm711, %v1338, 0.0
    %v1373 = vrot.slane %v1372, 4
    %v1374 = vadd.f32 %v1372, %v1373
    %v1375 = vrot.slane %v1374, 2
    %v1376 = vadd.f32 %v1374, %v1375
    %v1377 = vrot.slane %v1376, 1
    %v1378 = vadd.f32 %v1376, %v1377
    %v1379 = vsel %vm711, %v1339, 0.0
    %v1380 = vrot.slane %v1379, 4
    %v1381 = vadd.f32 %v1379, %v1380
    %v1382 = vrot.slane %v1381, 2
    %v1383 = vadd.f32 %v1381, %v1382
    %v1384 = vrot.slane %v1383, 1
    %v1385 = vadd.f32 %v1383, %v1384
    %v1386 = vsel %vm711, %v1340, 0.0
    %v1387 = vrot.slane %v1386, 4
    %v1388 = vadd.f32 %v1386, %v1387
    %v1389 = vrot.slane %v1388, 2
    %v1390 = vadd.f32 %v1388, %v1389
    %v1391 = vrot.slane %v1390, 1
    %v1392 = vadd.f32 %v1390, %v1391
    %v1393 = vsel %vm711, %v1341, 0.0
    %v1394 = vrot.slane %v1393, 4
    %v1395 = vadd.f32 %v1393, %v1394
    %v1396 = vrot.slane %v1395, 2
    %v1397 = vadd.f32 %v1395, %v1396
    %v1398 = vrot.slane %v1397, 1
    %v1399 = vadd.f32 %v1397, %v1398
    %v1400 = vsel %vm711, %v1342, 0.0
    %v1401 = vrot.slane %v1400, 4
    %v1402 = vadd.f32 %v1400, %v1401
    %v1403 = vrot.slane %v1402, 2
    %v1404 = vadd.f32 %v1402, %v1403
    %v1405 = vrot.slane %v1404, 1
    %v1406 = vadd.f32 %v1404, %v1405
    %v1407 = vsel %vm711, %v1343, 0.0
    %v1408 = vrot.slane %v1407, 4
    %v1409 = vadd.f32 %v1407, %v1408
    %v1410 = vrot.slane %v1409, 2
    %v1411 = vadd.f32 %v1409, %v1410
    %v1412 = vrot.slane %v1411, 1
    %v1413 = vadd.f32 %v1411, %v1412
    %v1414 = vsel %vm711, %v1344, 0.0
    %v1415 = vrot.slane %v1414, 4
    %v1416 = vadd.f32 %v1414, %v1415
    %v1417 = vrot.slane %v1416, 2
    %v1418 = vadd.f32 %v1416, %v1417
    %v1419 = vrot.slane %v1418, 1
    %v1420 = vadd.f32 %v1418, %v1419
    %v1421 = vsel %vm711, %v1345, 0.0
    %v1422 = vrot.slane %v1421, 4
    %v1423 = vadd.f32 %v1421, %v1422
    %v1424 = vrot.slane %v1423, 2
    %v1425 = vadd.f32 %v1423, %v1424
    %v1426 = vrot.slane %v1425, 1
    %v1427 = vadd.f32 %v1425, %v1426
    %v1428 = vsel %vm711, %v1346, 0.0
    %v1429 = vrot.slane %v1428, 4
    %v1430 = vadd.f32 %v1428, %v1429
    %v1431 = vrot.slane %v1430, 2
    %v1432 = vadd.f32 %v1430, %v1431
    %v1433 = vrot.slane %v1432, 1
    %v1434 = vadd.f32 %v1432, %v1433
    %v1435 = vsel %vm711, %v1347, 0.0
    %v1436 = vrot.slane %v1435, 4
    %v1437 = vadd.f32 %v1435, %v1436
    %v1438 = vrot.slane %v1437, 2
    %v1439 = vadd.f32 %v1437, %v1438
    %v1440 = vrot.slane %v1439, 1
    %v1441 = vadd.f32 %v1439, %v1440
    %v1442 = vsel %vm711, %v1348, 0.0
    %v1443 = vrot.slane %v1442, 4
    %v1444 = vadd.f32 %v1442, %v1443
    %v1445 = vrot.slane %v1444, 2
    %v1446 = vadd.f32 %v1444, %v1445
    %v1447 = vrot.slane %v1446, 1
    %v1448 = vadd.f32 %v1446, %v1447
    %v1449 = vsel %vm711, %v1349, 0.0
    %v1450 = vrot.slane %v1449, 4
    %v1451 = vadd.f32 %v1449, %v1450
    %v1452 = vrot.slane %v1451, 2
    %v1453 = vadd.f32 %v1451, %v1452
    %v1454 = vrot.slane %v1453, 1
    %v1455 = vadd.f32 %v1453, %v1454
    %v1456 = vsel %vm711, %v1350, 0.0
    %v1457 = vrot.slane %v1456, 4
    %v1458 = vadd.f32 %v1456, %v1457
    %v1459 = vrot.slane %v1458, 2
    %v1460 = vadd.f32 %v1458, %v1459
    %v1461 = vrot.slane %v1460, 1
    %v1462 = vadd.f32 %v1460, %v1461
    %v1463 = vmul.f32 %v1357, 0.125
    %v1464 = vmul.f32 %v1364, 0.125
    %v1465 = vmul.f32 %v1371, 0.125
    %v1466 = vmul.f32 %v1378, 0.125
    %v1467 = vmul.f32 %v1385, 0.125
    %v1468 = vmul.f32 %v1392, 0.125
    %v1469 = vmul.f32 %v1399, 0.125
    %v1470 = vmul.f32 %v1406, 0.125
    %v1471 = vmul.f32 %v1413, 0.125
    %v1472 = vmul.f32 %v1420, 0.125
    %v1473 = vmul.f32 %v1427, 0.125
    %v1474 = vmul.f32 %v1434, 0.125
    %v1475 = vmul.f32 %v1441, 0.125
    %v1476 = vmul.f32 %v1448, 0.125
    %v1477 = vmul.f32 %v1455, 0.125
    %v1478 = vmul.f32 %v1462, 0.125
    %v1479 = vld [vmem:[%s4] sm:$0x3]
    %v1480 = vld [vmem:[%s5] sm:$0x3]
    %1482 = vset.pattern.permute.xlu0 0
    %1483 = vperm.xlu0 %1482, %v1480
    %v1484 = vpop.permute.xlu0 %1483
    %vm1502 = vcmask 1041409
    %v1503 = vsel %vm1502, %v1464, %v1463
    %vm1504 = vcmask 1042434
    %v1505 = vsel %vm1504, %v1465, %v1503
    %vm1506 = vcmask 1043459
    %v1507 = vsel %vm1506, %v1466, %v1505
    %vm1508 = vcmask 1044484
    %v1509 = vsel %vm1508, %v1467, %v1507
    %vm1510 = vcmask 1045509
    %v1511 = vsel %vm1510, %v1468, %v1509
    %vm1512 = vcmask 1046534
    %v1513 = vsel %vm1512, %v1469, %v1511
    %vm1514 = vcmask 1047559
    %v1515 = vsel %vm1514, %v1470, %v1513
    %v1516 = vsel %vm1502, %v1472, %v1471
    %v1517 = vsel %vm1504, %v1473, %v1516
    %v1518 = vsel %vm1506, %v1474, %v1517
    %v1519 = vsel %vm1508, %v1475, %v1518
    %v1520 = vsel %vm1510, %v1476, %v1519
    %v1521 = vsel %vm1512, %v1477, %v1520
    %v1522 = vsel %vm1514, %v1478, %v1521
    %v1524 = vsel %vm711, %v1479, 0
    %v1526 = vsel %vm711, %v1515, 0
    %v1528 = vsel %vm711, %v1522, 0
    %1530 = vmatprep.subr.mxu0 0.0
    %1531 = vmatpush1.xpose.msra.mxu0 %v1526
    %1532 = vmatprep.subr.mxu0 0.0
    %1533 = vmatpush1.xpose.msra.mxu0 %v1528
    %1534 = vmatprep.subr.mxu0 0.0
    %1535 = vmatpush1.xpose.msra.mxu0 0.0
    %1536 = vmatprep.subr.mxu0 0.0
    %1537 = vmatpush1.xpose.msra.mxu0 0.0
    %1538 = vmatprep.subr.mxu0 0.0
    %1539 = vmatpush1.xpose.msra.mxu0 0.0
    %1540 = vmatprep.subr.mxu0 0.0
    %1541 = vmatpush1.xpose.msra.mxu0 0.0
    %1542 = vmatprep.subr.mxu0 0.0
    %1543 = vmatpush1.xpose.msra.mxu0 0.0
    %1544 = vmatprep.subr.mxu0 0.0
    %1545 = vmatpush1.xpose.msra.mxu0 0.0
    %1546 = vmatprep.subr.mxu0 0.0
    %1547 = vmatpush1.xpose.msra.mxu0 0.0
    %1548 = vmatprep.subr.mxu0 0.0
    %1549 = vmatpush1.xpose.msra.mxu0 0.0
    %1550 = vmatprep.subr.mxu0 0.0
    %1551 = vmatpush1.xpose.msra.mxu0 0.0
    %1552 = vmatprep.subr.mxu0 0.0
    %1553 = vmatpush1.xpose.msra.mxu0 0.0
    %1554 = vmatprep.subr.mxu0 0.0
    %1555 = vmatpush1.xpose.msra.mxu0 0.0
    %1556 = vmatprep.subr.mxu0 0.0
    %1557 = vmatpush1.xpose.msra.mxu0 0.0
    %1558 = vmatprep.subr.mxu0 0.0
    %1559 = vmatpush1.xpose.msra.mxu0 0.0
    %1560 = vmatprep.subr.mxu0 0.0
    %1561 = vmatpush1.xpose.msra.mxu0 0.0
    %1562 = vmatprep.subr.mxu0 0.0
    %1563 = vmatpush1.xpose.msra.mxu0 0.0
    %1564 = vmatprep.subr.mxu0 0.0
    %1565 = vmatpush1.xpose.msra.mxu0 0.0
    %1566 = vmatprep.subr.mxu0 0.0
    %1567 = vmatpush1.xpose.msra.mxu0 0.0
    %1568 = vmatprep.subr.mxu0 0.0
    %1569 = vmatpush1.xpose.msra.mxu0 0.0
    %1570 = vmatprep.subr.mxu0 0.0
    %1571 = vmatpush1.xpose.msra.mxu0 0.0
    %1572 = vmatprep.subr.mxu0 0.0
    %1573 = vmatpush1.xpose.msra.mxu0 0.0
    %1574 = vmatprep.subr.mxu0 0.0
    %1575 = vmatpush1.xpose.msra.mxu0 0.0
    %1576 = vmatprep.subr.mxu0 0.0
    %1577 = vmatpush1.xpose.msra.mxu0 0.0
    %1578 = vmatprep.subr.mxu0 0.0
    %1579 = vmatpush1.xpose.msra.mxu0 0.0
    %1580 = vmatprep.subr.mxu0 0.0
    %1581 = vmatpush1.xpose.msra.mxu0 0.0
    %1582 = vmatprep.subr.mxu0 0.0
    %1583 = vmatpush1.xpose.msra.mxu0 0.0
    %1584 = vmatprep.subr.mxu0 0.0
    %1585 = vmatpush1.xpose.msra.mxu0 0.0
    %1586 = vmatprep.subr.mxu0 0.0
    %1587 = vmatpush1.xpose.msra.mxu0 0.0
    %1588 = vmatprep.subr.mxu0 0.0
    %1589 = vmatpush1.xpose.msra.mxu0 0.0
    %1590 = vmatprep.subr.mxu0 0.0
    %1591 = vmatpush1.xpose.msra.mxu0 0.0
    %1592 = vmatprep.subr.mxu0 0.0
    %1593 = vmatpush1.xpose.msra.mxu0 0.0
    %1594 = vmatprep.mubr.f32.mxu0 0.0
    %1595 = vmatmul.mubr.f32.gmra.mrb[0].mxu0 %v1524
    %v1596 = vpop.f32.mrb[0].mxu0
    %v1597 = vadd.f32 %v1484, %v1596
    %v1598 = vpop.f32.mrb[0].mxu0
    %1599 = vdwg.mxu0
    %vm1600 = vcmask 123904
    %1601 = vst.msk [vmem:[#allocation2] sm:$0x3] %vm1600, %v1597
    // Predicated region
    $region26: #{tpu_custom_call.1} parent=1 // pred_check
      _
    $region27: #{tpu_custom_call.1} parent=1 // pred_check_branch
      %1603 = sbr.rel (0) target = $region29
    $region28: #{tpu_custom_call.1} parent=1 // pred_region
      %s1605 = ssub.s32 32, 32
      %1606 = vsyncadd [#allocation3], %s1605
      %s1608 = sshll.u32 [#allocation2], 4
      %s1609 = int_to_ptr.vmem [resolvable:$true] %s1608
      %1611 = dma.vmem_to_hbm [thread:$0]  %s1609, 32, %s6, [#allocation3]
    $region29: #{tpu_custom_call.1} parent=1 // pred_fallthru
      _
    // Predicated region
    $region30: #{tpu_custom_call.1} parent=1 // pred_check
      _
    $region31: #{tpu_custom_call.1} parent=1 // pred_check_branch
      %1613 = sbr.rel (0) target = $region33
    $region32: #{tpu_custom_call.1} parent=1 // pred_region
      %1614 = dma.done [#allocation3], 32
    $region33: #{tpu_custom_call.1} parent=1 // pred_fallthru
      _
    %1615 = vsyncpa [#allocation3], 1

</llo_original>
